<compile_context>
chip_gen: v7x
topology: tpu7x:2x2x1
jax: 0.10.0
libtpu: 0.0.40
codegen_flags: <defaults>
</compile_context>

<pallas_src>
import functools

import jax
import jax.numpy as jnp
from jax.experimental import pallas as pl
from jax.experimental.pallas import tpu as pltpu

NEG_SLOPE = 0.2  # LeakyReLU negative slope from the module


def _leaky_relu(x):
    # max(x, a*x) == leaky_relu(x) for a < 1; saves a compare+select vs. where.
    return jnp.maximum(x, NEG_SLOPE * x)


def _default_num_blocks():
    """1 grid step on single-TensorCore chips (v5e/v6e), 2 balanced steps on v7x."""
    try:
        kind = jax.devices()[0].device_kind.lower()
    except Exception:
        return 1
    return 2 if ("v7" in kind or "7x" in kind) else 1


def gatedge_kernel(slab_ref,   # (Bb, 2M+1, O) f32: rows [adjT(M) | edgeT(M) | el(1)]
                   src_ref,    # (Bb, O, HF)   f32: feat_src_proj = h_src @ w_src
                   dst_ref,    # (Bb, M, HF+1) f32: cols [feat_dst_proj(HF) | er(1)]
                   par_ref,    # (1, HF+1)     f32: [w_edge(HF) | c_e(1)]
                   out_ref,    # (Bb, M, HF)   f32
                   *, M, HF):
    slab = slab_ref[...]
    adjT = slab[:, 0:M, :]                     # (Bb, M, O)  adjacency, machine-major
    edgeT = slab[:, M:2 * M, :]                # (Bb, M, O)  raw edge features
    el_row = slab[:, 2 * M:2 * M + 1, :]       # (Bb, 1, O)  <feat_src_proj, attn_l>

    feat_src = src_ref[...]                    # (Bb, O, HF)
    dst = dst_ref[...]
    feat_dst = dst[:, :, 0:HF]                 # (Bb, M, HF)
    er_col = dst[:, :, HF:HF + 1]              # (Bb, M, 1)  <feat_dst_proj, attn_r>

    par = par_ref[...]
    w_edge = par[:, 0:HF]                      # (1, HF)
    c_e = par[:, HF:HF + 1]                    # (1, 1)      <w_edge, attn_e>

    # Attention pre-activations.
    aT = adjT * (el_row + er_col) + edgeT * c_e                 # (Bb, M, O)
    eijkT = _leaky_relu(aT)                                     # (Bb, M, O)
    er2 = er_col + er_col
    ekk = _leaky_relu(er2)                                      # (Bb, M, 1)

    # Masked softmax over {operations, self} per machine (reduction on lane axis).
    # Mask BEFORE the exp so non-edge lanes never see overflow/NaN junk.
    is_edge = adjT > 0.5                                        # adjT is a {0,1} cast
    neg_inf = jnp.float32(-jnp.inf)
    e_masked = jnp.where(is_edge, eijkT, neg_inf)               # (Bb, M, O)
    m = jnp.maximum(jnp.max(e_masked, axis=-1, keepdims=True), ekk)   # (Bb, M, 1)
    p1 = jnp.exp(e_masked - m)                                  # exp(-inf)=0 on non-edges
    p2 = jnp.exp(ekk - m)                                       # (Bb, M, 1)
    inv = 1.0 / (jnp.sum(p1, axis=-1, keepdims=True) + p2)      # (Bb, M, 1)
    alphaT = p1 * inv                                           # (Bb, M, O)
    alpha_kk = p2 * inv                                         # (Bb, M, 1)

    # Aggregation:
    #   b[k, f] = sum_i alpha[i,k] * (edge[i,k] * w_edge[f] + feat_src_proj[i, f])
    #           = s_edge[k] * w_edge[f] + (alphaT @ feat_src_proj)[k, f]
    s_edge = jnp.sum(edgeT * alphaT, axis=-1, keepdims=True)    # (Bb, M, 1)
    agg = jnp.einsum('bmo,bof->bmf', alphaT, feat_src,
                     preferred_element_type=jnp.float32)        # (Bb, M, HF) on MXU

    out_ref[...] = jax.nn.sigmoid(agg + s_edge * w_edge + feat_dst * alpha_kk)


def gatedge_forward(ope_ma_adj, batch_idxes, feat_ope, feat_ma, feat_edge,
                    w_src, w_dst, w_edge, attn_l, attn_r, attn_e,
                    *, num_blocks=None):
    B = batch_idxes.shape[0]
    _, O, M = ope_ma_adj.shape
    HF = w_src.shape[-1]

    if num_blocks is None:
        num_blocks = _default_num_blocks()
    num_blocks = max(1, min(num_blocks, B))
    Bb = -(-B // num_blocks)            # ceil(B / num_blocks): equal, B-covering blocks
    Bp = Bb * num_blocks
    pad = Bp - B                        # 0 when num_blocks divides B (demo: 0)

    # Hoisted, batch-cheap math (all fuses into one small XLA pass over B graphs):
    # projections, attention dot-products, gather + cast + transpose + concat.
    feat_src_proj = feat_ope.astype(jnp.float32) @ w_src                 # (B, O, HF)
    feat_dst_proj = feat_ma.astype(jnp.float32) @ w_dst                  # (B, M, HF)
    el = jnp.sum(feat_src_proj * attn_l[0], axis=-1)                     # (B, O)
    er = jnp.sum(feat_dst_proj * attn_r[0], axis=-1)                     # (B, M)
    c_e = jnp.sum(w_edge * attn_e)                                       # scalar

    adjT = jnp.transpose(ope_ma_adj[batch_idxes].astype(jnp.float32), (0, 2, 1))  # (B, M, O)
    edgeT = jnp.transpose(feat_edge.astype(jnp.float32), (0, 2, 1))               # (B, M, O)
    slab = jnp.concatenate([adjT, edgeT, el[:, None, :]], axis=1)        # (B, 2M+1, O)
    dst = jnp.concatenate([feat_dst_proj, er[..., None]], axis=-1)       # (B, M, HF+1)

    if pad:
        slab = jnp.pad(slab, ((0, pad), (0, 0), (0, 0)))
        feat_src_proj = jnp.pad(feat_src_proj, ((0, pad), (0, 0), (0, 0)))
        dst = jnp.pad(dst, ((0, pad), (0, 0), (0, 0)))

    params = jnp.concatenate(
        [w_edge.astype(jnp.float32), jnp.reshape(c_e, (1, 1))], axis=-1)  # (1, HF+1)

    kernel = functools.partial(gatedge_kernel, M=M, HF=HF)
    out = pl.pallas_call(
        kernel,
        out_shape=jax.ShapeDtypeStruct((Bp, M, HF), jnp.float32),
        grid=(num_blocks,),
        in_specs=[
            pl.BlockSpec((Bb, 2 * M + 1, O), lambda b: (b, 0, 0)),   # packed adjT|edgeT|el
            pl.BlockSpec((Bb, O, HF), lambda b: (b, 0, 0)),          # feat_src_proj
            pl.BlockSpec((Bb, M, HF + 1), lambda b: (b, 0, 0)),      # feat_dst_proj | er
            pl.BlockSpec((1, HF + 1), lambda b: (0, 0)),             # grid-invariant params
        ],
        out_specs=pl.BlockSpec((Bb, M, HF), lambda b: (b, 0, 0)),
        compiler_params=pltpu.CompilerParams(dimension_semantics=("parallel",)),
    )(slab, feat_src_proj, dst, params)
    return out[:B]


def gatedge_reference(ope_ma_adj, batch_idxes, feat_ope, feat_ma, feat_edge,
                      w_src, w_dst, w_edge, attn_l, attn_r, attn_e):
    """Plain-JAX mirror of the PyTorch forward (for validation)."""
    adj = ope_ma_adj[batch_idxes].astype(jnp.float32)            # (B, O, M)
    B, O, M = adj.shape
    feat_src = feat_ope @ w_src                                   # (B, O, HF)
    feat_dst = feat_ma @ w_dst                                    # (B, M, HF)
    fe = feat_edge[..., None] * w_edge[0]                         # (B, O, M, HF)
    el = jnp.sum(feat_src * attn_l[0], -1)[..., None]             # (B, O, 1)
    er = jnp.sum(feat_dst * attn_r[0], -1)[..., None]             # (B, M, 1)
    ee = jnp.sum(fe * attn_e[0], -1)[..., None]                   # (B, O, M, 1)
    el_add_ee = adj[..., None] * el[..., None, :] + ee
    a = el_add_ee + adj[..., None] * er[:, None, :, :]
    eijk = _leaky_relu(a)
    ekk = _leaky_relu(er + er)
    mask = jnp.concatenate([adj[..., None] == 1,
                            jnp.ones((B, 1, M, 1), bool)], axis=-3)
    e = jnp.concatenate([eijk, ekk[:, None]], axis=-3)
    e = jnp.where(mask, e, -jnp.inf)
    alpha = jax.nn.softmax(e[..., 0], axis=-2)                    # (B, O+1, M)
    alpha_ijk = alpha[..., :-1, :]
    alpha_kk = alpha[..., -1, :]
    Wmu = fe + feat_src[..., None, :]
    bsum = jnp.sum(Wmu * alpha_ijk[..., None], axis=-3)           # (B, M, HF)
    c = feat_dst * alpha_kk[..., None]
    return jax.nn.sigmoid(bsum + c)


if __name__ == "__main__":
    # Shapes consistent with GATedge((6, 3), 8, num_head=1)
    B_total, B = 12, 10
    num_opes, num_mas = 10, 5
    in_src, in_dst = 6, 3
    out_feats, num_head = 8, 1
    HF = out_feats * num_head

    key = jax.random.PRNGKey(0)
    ks = jax.random.split(key, 12)

    gain = jnp.sqrt(2.0)  # nn.init.calculate_gain('relu')

    def xavier(k, shape):
        fan_in, fan_out = shape[0], shape[-1]
        std = gain * jnp.sqrt(2.0 / (fan_in + fan_out))
        return (std * jax.random.normal(k, shape)).astype(jnp.float32)

    # Parameters (weights stored as (in, out); equals PyTorch Linear weight transposed)
    w_src = xavier(ks[0], (in_src, HF))
    w_dst = xavier(ks[1], (in_dst, HF))
    w_edge = xavier(ks[2], (1, HF))
    attn_l = xavier(ks[3], (1, HF))
    attn_r = xavier(ks[4], (1, HF))
    attn_e = xavier(ks[5], (1, HF))
    # TODO(synk): feat_drop / attn_drop are treated as eval-mode identity (attn_drop is unused in forward anyway).

    # Inputs
    ope_ma_adj = (jax.random.uniform(ks[6], (B_total, num_opes, num_mas)) < 0.5).astype(jnp.int32)
    batch_idxes = jax.random.permutation(ks[10], B_total)[:B].astype(jnp.int32)
    feat_ope = jax.random.normal(ks[7], (B, num_opes, in_src), jnp.float32)
    feat_ma = jax.random.normal(ks[8], (B, num_mas, in_dst), jnp.float32)
    feat_edge = jax.random.uniform(ks[9], (B, num_opes, num_mas), jnp.float32)

    out = gatedge_forward(ope_ma_adj, batch_idxes, feat_ope, feat_ma, feat_edge,
                          w_src, w_dst, w_edge, attn_l, attn_r, attn_e)
    out = jax.block_until_ready(out)

    ref = gatedge_reference(ope_ma_adj, batch_idxes, feat_ope, feat_ma, feat_edge,
                            w_src, w_dst, w_edge, attn_l, attn_r, attn_e)
    ref = jax.block_until_ready(ref)

    assert out.shape == (B, num_mas, HF), out.shape
    assert jnp.allclose(out, ref, rtol=1e-4, atol=1e-5), \
        f"max abs diff = {jnp.max(jnp.abs(out - ref))}"
    print("KERNEL_OK")
</pallas_src>

<mosaic_0001>
module attributes {stable_mosaic.version = 11 : i64} {
  func.func @gatedge_kernel(%arg0: i32, %arg1: memref<10x11x10xf32, #tpu.memory_space<vmem>>, %arg2: memref<10x10x8xf32, #tpu.memory_space<vmem>>, %arg3: memref<10x5x9xf32, #tpu.memory_space<vmem>>, %arg4: memref<1x9xf32, #tpu.memory_space<vmem>>, %arg5: memref<10x5x8xf32, #tpu.memory_space<vmem>>) attributes {dimension_semantics = [#tpu.dimension_semantics<parallel>], iteration_bounds = array<i64: 1>, scalar_prefetch = 0 : i64, scratch_operands = 0 : i64, tpu.core_type = #tpu.core_type<tc>, window_params = [{transform_indices = @transform_0, window_bounds = array<i64: 10, 11, 10>}, {transform_indices = @transform_1, window_bounds = array<i64: 10, 10, 8>}, {transform_indices = @transform_2, window_bounds = array<i64: 10, 5, 9>}, {pipeline_mode = #tpu.pipeline_mode<synchronous>, transform_indices = @transform_3, window_bounds = array<i64: 1, 9>}, {transform_indices = @transform_4, window_bounds = array<i64: 10, 5, 8>}]} {
    %c0 = arith.constant 0 : index
    %c0_0 = arith.constant 0 : index
    %c0_1 = arith.constant 0 : index
    %0 = vector.load %arg1[%c0, %c0_0, %c0_1] : memref<10x11x10xf32, #tpu.memory_space<vmem>>, vector<10x11x10xf32>
    %1 = vector.extract_strided_slice %0 {offsets = [0, 0, 0], sizes = [10, 5, 10], strides = [1, 1, 1]} : vector<10x11x10xf32> to vector<10x5x10xf32>
    %2 = vector.extract_strided_slice %0 {offsets = [0, 5, 0], sizes = [10, 5, 10], strides = [1, 1, 1]} : vector<10x11x10xf32> to vector<10x5x10xf32>
    %3 = vector.extract_strided_slice %0 {offsets = [0, 10, 0], sizes = [10, 1, 10], strides = [1, 1, 1]} : vector<10x11x10xf32> to vector<10x1x10xf32>
    %c0_2 = arith.constant 0 : index
    %c0_3 = arith.constant 0 : index
    %c0_4 = arith.constant 0 : index
    %4 = vector.load %arg2[%c0_2, %c0_3, %c0_4] : memref<10x10x8xf32, #tpu.memory_space<vmem>>, vector<10x10x8xf32>
    %c0_5 = arith.constant 0 : index
    %c0_6 = arith.constant 0 : index
    %c0_7 = arith.constant 0 : index
    %5 = vector.load %arg3[%c0_5, %c0_6, %c0_7] : memref<10x5x9xf32, #tpu.memory_space<vmem>>, vector<10x5x9xf32>
    %6 = vector.extract_strided_slice %5 {offsets = [0, 0, 0], sizes = [10, 5, 8], strides = [1, 1, 1]} : vector<10x5x9xf32> to vector<10x5x8xf32>
    %7 = vector.extract_strided_slice %5 {offsets = [0, 0, 8], sizes = [10, 5, 1], strides = [1, 1, 1]} : vector<10x5x9xf32> to vector<10x5x1xf32>
    %c0_8 = arith.constant 0 : index
    %c0_9 = arith.constant 0 : index
    %8 = vector.load %arg4[%c0_8, %c0_9] : memref<1x9xf32, #tpu.memory_space<vmem>>, vector<1x9xf32>
    %9 = vector.extract_strided_slice %8 {offsets = [0, 0], sizes = [1, 8], strides = [1, 1]} : vector<1x9xf32> to vector<1x8xf32>
    %10 = vector.extract_strided_slice %8 {offsets = [0, 8], sizes = [1, 1], strides = [1, 1]} : vector<1x9xf32> to vector<1x1xf32>
    %11 = vector.broadcast %3 : vector<10x1x10xf32> to vector<10x5x10xf32>
    %12 = vector.broadcast %7 : vector<10x5x1xf32> to vector<10x5x10xf32>
    %13 = arith.addf %11, %12 : vector<10x5x10xf32>
    %14 = arith.mulf %1, %13 : vector<10x5x10xf32>
    %15 = vector.shape_cast %10 : vector<1x1xf32> to vector<1x1x1xf32>
    %16 = vector.broadcast %15 : vector<1x1x1xf32> to vector<10x5x10xf32>
    %17 = arith.mulf %2, %16 : vector<10x5x10xf32>
    %18 = arith.addf %14, %17 : vector<10x5x10xf32>
    %cst = arith.constant 2.000000e-01 : f32
    %19 = vector.broadcast %cst : f32 to vector<10x5x10xf32>
    %20 = arith.mulf %19, %18 : vector<10x5x10xf32>
    %21 = arith.maximumf %18, %20 : vector<10x5x10xf32>
    %22 = arith.addf %7, %7 : vector<10x5x1xf32>
    %cst_10 = arith.constant 2.000000e-01 : f32
    %23 = vector.broadcast %cst_10 : f32 to vector<10x5x1xf32>
    %24 = arith.mulf %23, %22 : vector<10x5x1xf32>
    %25 = arith.maximumf %22, %24 : vector<10x5x1xf32>
    %cst_11 = arith.constant 5.000000e-01 : f32
    %26 = vector.broadcast %cst_11 : f32 to vector<10x5x10xf32>
    %27 = arith.cmpf ogt, %1, %26 : vector<10x5x10xf32>
    %cst_12 = arith.constant 0xFF800000 : f32
    %28 = vector.broadcast %cst_12 : f32 to vector<10x5x10xf32>
    %29 = arith.select %27, %21, %28 : vector<10x5x10xi1>, vector<10x5x10xf32>
    %cst_13 = arith.constant dense<0xFF800000> : vector<10x5xf32>
    %30 = vector.multi_reduction <maximumf>, %29, %cst_13 [2] : vector<10x5x10xf32> to vector<10x5xf32>
    %31 = vector.shape_cast %30 : vector<10x5xf32> to vector<10x5x1xf32>
    %32 = arith.maximumf %31, %25 : vector<10x5x1xf32>
    %33 = vector.broadcast %32 : vector<10x5x1xf32> to vector<10x5x10xf32>
    %34 = arith.subf %29, %33 : vector<10x5x10xf32>
    %35 = math.exp %34 : vector<10x5x10xf32>
    %36 = arith.subf %25, %32 : vector<10x5x1xf32>
    %37 = math.exp %36 : vector<10x5x1xf32>
    %cst_14 = arith.constant dense<0.000000e+00> : vector<10x5xf32>
    %38 = vector.multi_reduction <add>, %35, %cst_14 [2] : vector<10x5x10xf32> to vector<10x5xf32>
    %39 = vector.shape_cast %38 : vector<10x5xf32> to vector<10x5x1xf32>
    %40 = arith.addf %39, %37 : vector<10x5x1xf32>
    %cst_15 = arith.constant 1.000000e+00 : f32
    %41 = vector.broadcast %cst_15 : f32 to vector<10x5x1xf32>
    %42 = arith.divf %41, %40 : vector<10x5x1xf32>
    %43 = vector.broadcast %42 : vector<10x5x1xf32> to vector<10x5x10xf32>
    %44 = arith.mulf %35, %43 : vector<10x5x10xf32>
    %45 = arith.mulf %37, %42 : vector<10x5x1xf32>
    %46 = arith.mulf %2, %44 : vector<10x5x10xf32>
    %cst_16 = arith.constant dense<0.000000e+00> : vector<10x5xf32>
    %47 = vector.multi_reduction <add>, %46, %cst_16 [2] : vector<10x5x10xf32> to vector<10x5xf32>
    %48 = vector.shape_cast %47 : vector<10x5xf32> to vector<10x5x1xf32>
    "tpu.trace_start"() <{level = 10 : i32, message = "bmo,bof->bmf"}> : () -> ()
    %cst_17 = arith.constant dense<0.000000e+00> : vector<10x5x8xf32>
    %49 = tpu.matmul %44, %4, %cst_17 {dimension_numbers = #tpu.dot_dimension_numbers<[2], [1], [1], [2], [0, 0, 0, 1, 1, 2], [0], [0]>} : vector<10x5x10xf32>, vector<10x10x8xf32>, vector<10x5x8xf32> -> vector<10x5x8xf32>
    "tpu.trace_stop"() : () -> ()
    %50 = vector.shape_cast %9 : vector<1x8xf32> to vector<1x1x8xf32>
    %51 = vector.broadcast %48 : vector<10x5x1xf32> to vector<10x5x8xf32>
    %52 = vector.broadcast %50 : vector<1x1x8xf32> to vector<10x5x8xf32>
    %53 = arith.mulf %51, %52 : vector<10x5x8xf32>
    %54 = arith.addf %49, %53 : vector<10x5x8xf32>
    %55 = vector.broadcast %45 : vector<10x5x1xf32> to vector<10x5x8xf32>
    %56 = arith.mulf %6, %55 : vector<10x5x8xf32>
    %57 = arith.addf %54, %56 : vector<10x5x8xf32>
    %58 = arith.negf %57 : vector<10x5x8xf32>
    %59 = math.exp %58 : vector<10x5x8xf32>
    %cst_18 = arith.constant 1.000000e+00 : f32
    %60 = vector.broadcast %cst_18 : f32 to vector<10x5x8xf32>
    %61 = arith.addf %60, %59 : vector<10x5x8xf32>
    %62 = arith.divf %60, %61 : vector<10x5x8xf32>
    %c0_19 = arith.constant 0 : index
    %c0_20 = arith.constant 0 : index
    %c0_21 = arith.constant 0 : index
    %63 = vector.load %arg5[%c0_19, %c0_20, %c0_21] : memref<10x5x8xf32, #tpu.memory_space<vmem>>, vector<10x5x8xf32>
    tpu.vector_store %arg5[%c0_19, %c0_20, %c0_21], %62 {strides = array<i32>} : memref<10x5x8xf32, #tpu.memory_space<vmem>>, vector<10x5x8xf32>,
    return
  }
  func.func @transform_0(%arg0: i32) -> (i32, i32, i32) {
    %c0_i32 = arith.constant 0 : i32
    %c0_i32_0 = arith.constant 0 : i32
    %c0_i32_1 = arith.constant 0 : i32
    return %arg0, %c0_i32, %c0_i32_0 : i32, i32, i32
  }
  func.func @transform_1(%arg0: i32) -> (i32, i32, i32) {
    %c0_i32 = arith.constant 0 : i32
    %c0_i32_0 = arith.constant 0 : i32
    %c0_i32_1 = arith.constant 0 : i32
    return %arg0, %c0_i32, %c0_i32_0 : i32, i32, i32
  }
  func.func @transform_2(%arg0: i32) -> (i32, i32, i32) {
    %c0_i32 = arith.constant 0 : i32
    %c0_i32_0 = arith.constant 0 : i32
    %c0_i32_1 = arith.constant 0 : i32
    return %arg0, %c0_i32, %c0_i32_0 : i32, i32, i32
  }
  func.func @transform_3(%arg0: i32) -> (i32, i32) {
    %c0_i32 = arith.constant 0 : i32
    %c0_i32_0 = arith.constant 0 : i32
    %c0_i32_1 = arith.constant 0 : i32
    return %c0_i32, %c0_i32_0 : i32, i32
  }
  func.func @transform_4(%arg0: i32) -> (i32, i32, i32) {
    %c0_i32 = arith.constant 0 : i32
    %c0_i32_0 = arith.constant 0 : i32
    %c0_i32_1 = arith.constant 0 : i32
    return %arg0, %c0_i32, %c0_i32_0 : i32, i32, i32
  }
}

</mosaic_0001>

<llo_original>
// kernel: tpu_custom_call.1
$region0: #{tpu_custom_call.1}
  #allocation0 [shape = 'u32[]', space=smem, size = 0x4, offset = 0x4, fixed_abs, tag = 'smem constant byte address 0x4 - core index']
  #allocation1 [shape = 'u32[144,128]{1,0:T(1,128)}', space=vmem, size = 0x12000, scoped, tag = 'internal scratch']
  %s0 = inlined_call_operand.vmem [shape: f32[10,11,10], index: 0, kind: input, shape index: {}]
  %s1 = inlined_call_operand.vmem [shape: f32[10,10,8], index: 1, kind: input, shape index: {}]
  %s2 = inlined_call_operand.vmem [shape: f32[10,5,9], index: 2, kind: input, shape index: {}]
  %s3 = inlined_call_operand.vmem [shape: f32[1,9], index: 3, kind: input, shape index: {}]
  %s4 = inlined_call_operand.vmem [shape: f32[10,5,8], index: 4, kind: output, shape index: {}]
  %s5 = sld [smem:[#allocation0]]
  $region26: #{tpu_custom_call.1} parent=0
    _
  %s7 = ssub.s32 1, %s5
  %s8 = scalar_select 0, %s7, %s5
  // Predicated region
  $region2: #{tpu_custom_call.1} parent=0 // pred_check
    _
  $region3: #{tpu_custom_call.1} parent=0 // pred_check_branch
    %10 = sbr.rel (0) target = $region5
  $region4: #{tpu_custom_call.1} parent=0 // pred_region
    _
  $region5: #{tpu_custom_call.1} parent=0 // pred_fallthru
    _
  // Predicated region
  $region6: #{tpu_custom_call.1} parent=0 // pred_check
    _
  $region7: #{tpu_custom_call.1} parent=0 // pred_check_branch
    %12 = sbr.rel (0) target = $region9
  $region8: #{tpu_custom_call.1} parent=0 // pred_region
    _
  $region9: #{tpu_custom_call.1} parent=0 // pred_fallthru
    _
  // Predicated region
  $region10: #{tpu_custom_call.1} parent=0 // pred_check
    _
  $region11: #{tpu_custom_call.1} parent=0 // pred_check_branch
    %14 = sbr.rel (0) target = $region13
  $region12: #{tpu_custom_call.1} parent=0 // pred_region
    _
  $region13: #{tpu_custom_call.1} parent=0 // pred_fallthru
    _
  // Predicated region
  $region14: #{tpu_custom_call.1} parent=0 // pred_check
    _
  $region15: #{tpu_custom_call.1} parent=0 // pred_check_branch
    %16 = sbr.rel (0) target = $region17
  $region16: #{tpu_custom_call.1} parent=0 // pred_region
    _
  $region17: #{tpu_custom_call.1} parent=0 // pred_fallthru
    _
  %v17 = vld [vmem:[%s0] sm:$0xff]
  %v18 = vld [vmem:[%s0 + $0x8] sm:$0x7]
  %v19 = vld [vmem:[%s0 + $0x10] sm:$0xff]
  %v20 = vld [vmem:[%s0 + $0x18] sm:$0x7]
  %v21 = vld [vmem:[%s0 + $0x20] sm:$0xff]
  %v22 = vld [vmem:[%s0 + $0x28] sm:$0x7]
  %v23 = vld [vmem:[%s0 + $0x30] sm:$0xff]
  %v24 = vld [vmem:[%s0 + $0x38] sm:$0x7]
  %v25 = vld [vmem:[%s0 + $0x40] sm:$0xff]
  %v26 = vld [vmem:[%s0 + $0x48] sm:$0x7]
  %v27 = vld [vmem:[%s0 + $0x50] sm:$0xff]
  %v28 = vld [vmem:[%s0 + $0x58] sm:$0x7]
  %v29 = vld [vmem:[%s0 + $0x60] sm:$0xff]
  %v30 = vld [vmem:[%s0 + $0x68] sm:$0x7]
  %v31 = vld [vmem:[%s0 + $0x70] sm:$0xff]
  %v32 = vld [vmem:[%s0 + $0x78] sm:$0x7]
  %v33 = vld [vmem:[%s0 + $0x80] sm:$0xff]
  %v34 = vld [vmem:[%s0 + $0x88] sm:$0x7]
  %v35 = vld [vmem:[%s0 + $0x90] sm:$0xff]
  %v36 = vld [vmem:[%s0 + $0x98] sm:$0x7]
  %v37 = vld [vmem:[%s1] sm:$0xff]
  %v38 = vld [vmem:[%s1 + $0x8] sm:$0x3]
  %v39 = vld [vmem:[%s1 + $0x10] sm:$0xff]
  %v40 = vld [vmem:[%s1 + $0x18] sm:$0x3]
  %v41 = vld [vmem:[%s1 + $0x20] sm:$0xff]
  %v42 = vld [vmem:[%s1 + $0x28] sm:$0x3]
  %v43 = vld [vmem:[%s1 + $0x30] sm:$0xff]
  %v44 = vld [vmem:[%s1 + $0x38] sm:$0x3]
  %v45 = vld [vmem:[%s1 + $0x40] sm:$0xff]
  %v46 = vld [vmem:[%s1 + $0x48] sm:$0x3]
  %v47 = vld [vmem:[%s1 + $0x50] sm:$0xff]
  %v48 = vld [vmem:[%s1 + $0x58] sm:$0x3]
  %v49 = vld [vmem:[%s1 + $0x60] sm:$0xff]
  %v50 = vld [vmem:[%s1 + $0x68] sm:$0x3]
  %v51 = vld [vmem:[%s1 + $0x70] sm:$0xff]
  %v52 = vld [vmem:[%s1 + $0x78] sm:$0x3]
  %v53 = vld [vmem:[%s1 + $0x80] sm:$0xff]
  %v54 = vld [vmem:[%s1 + $0x88] sm:$0x3]
  %v55 = vld [vmem:[%s1 + $0x90] sm:$0xff]
  %v56 = vld [vmem:[%s1 + $0x98] sm:$0x3]
  %v57 = vld [vmem:[%s2] sm:$0x1f]
  %v58 = vld [vmem:[%s2 + $0x8] sm:$0x1f]
  %v59 = vld [vmem:[%s2 + $0x10] sm:$0x1f]
  %v60 = vld [vmem:[%s2 + $0x18] sm:$0x1f]
  %v61 = vld [vmem:[%s2 + $0x20] sm:$0x1f]
  %v62 = vld [vmem:[%s2 + $0x28] sm:$0x1f]
  %v63 = vld [vmem:[%s2 + $0x30] sm:$0x1f]
  %v64 = vld [vmem:[%s2 + $0x38] sm:$0x1f]
  %v65 = vld [vmem:[%s2 + $0x40] sm:$0x1f]
  %v66 = vld [vmem:[%s2 + $0x48] sm:$0x1f]
  %v67 = vld [vmem:[%s3] sm:$0x1]
  %v68 = vlaneseq
  %v69 = vshrl.u32 %v68, 7
  %v70 = vsub.s32 2, %v69
  %v71 = vrot.slane %v18, %v70
  %v72 = vlaneseq
  %v73 = vshrl.u32 %v72, 7
  %v74 = vsub.s32 2, %v73
  %v75 = vrot.slane %v20, %v74
  %v76 = vlaneseq
  %v77 = vshrl.u32 %v76, 7
  %v78 = vsub.s32 2, %v77
  %v79 = vrot.slane %v22, %v78
  %v80 = vlaneseq
  %v81 = vshrl.u32 %v80, 7
  %v82 = vsub.s32 2, %v81
  %v83 = vrot.slane %v24, %v82
  %v84 = vlaneseq
  %v85 = vshrl.u32 %v84, 7
  %v86 = vsub.s32 2, %v85
  %v87 = vrot.slane %v26, %v86
  %v88 = vlaneseq
  %v89 = vshrl.u32 %v88, 7
  %v90 = vsub.s32 2, %v89
  %v91 = vrot.slane %v28, %v90
  %v92 = vlaneseq
  %v93 = vshrl.u32 %v92, 7
  %v94 = vsub.s32 2, %v93
  %v95 = vrot.slane %v30, %v94
  %v96 = vlaneseq
  %v97 = vshrl.u32 %v96, 7
  %v98 = vsub.s32 2, %v97
  %v99 = vrot.slane %v32, %v98
  %v100 = vlaneseq
  %v101 = vshrl.u32 %v100, 7
  %v102 = vsub.s32 2, %v101
  %v103 = vrot.slane %v34, %v102
  %v104 = vlaneseq
  %v105 = vshrl.u32 %v104, 7
  %v106 = vsub.s32 2, %v105
  %v107 = vrot.slane %v36, %v106
  %109 = vset.pattern.permute.xlu0 8
  %110 = vperm.xlu0 %109, %v57
  %v111 = vpop.permute.xlu0 %110
  %114 = vset.pattern.permute.xlu0 8
  %115 = vperm.xlu0 %114, %v58
  %v116 = vpop.permute.xlu0 %115
  %119 = vset.pattern.permute.xlu0 8
  %120 = vperm.xlu0 %119, %v59
  %v121 = vpop.permute.xlu0 %120
  %124 = vset.pattern.permute.xlu0 8
  %125 = vperm.xlu0 %124, %v60
  %v126 = vpop.permute.xlu0 %125
  %129 = vset.pattern.permute.xlu0 8
  %130 = vperm.xlu0 %129, %v61
  %v131 = vpop.permute.xlu0 %130
  %134 = vset.pattern.permute.xlu0 8
  %135 = vperm.xlu0 %134, %v62
  %v136 = vpop.permute.xlu0 %135
  %139 = vset.pattern.permute.xlu0 8
  %140 = vperm.xlu0 %139, %v63
  %v141 = vpop.permute.xlu0 %140
  %144 = vset.pattern.permute.xlu0 8
  %145 = vperm.xlu0 %144, %v64
  %v146 = vpop.permute.xlu0 %145
  %149 = vset.pattern.permute.xlu0 8
  %150 = vperm.xlu0 %149, %v65
  %v151 = vpop.permute.xlu0 %150
  %154 = vset.pattern.permute.xlu0 8
  %155 = vperm.xlu0 %154, %v66
  %v156 = vpop.permute.xlu0 %155
  %v158 = vadd.f32 %v71, %v111
  %v159 = vadd.f32 %v75, %v116
  %v160 = vadd.f32 %v79, %v121
  %v161 = vadd.f32 %v83, %v126
  %v162 = vadd.f32 %v87, %v131
  %v163 = vadd.f32 %v91, %v136
  %v164 = vadd.f32 %v95, %v141
  %v165 = vadd.f32 %v99, %v146
  %v166 = vadd.f32 %v103, %v151
  %v167 = vadd.f32 %v107, %v156
  %v168 = vmul.f32 %v17, %v158
  %v169 = vmul.f32 %v19, %v159
  %v170 = vmul.f32 %v21, %v160
  %v171 = vmul.f32 %v23, %v161
  %v172 = vmul.f32 %v25, %v162
  %v173 = vmul.f32 %v27, %v163
  %v174 = vmul.f32 %v29, %v164
  %v175 = vmul.f32 %v31, %v165
  %v176 = vmul.f32 %v33, %v166
  %v177 = vmul.f32 %v35, %v167
  %v179 = vlaneseq
  %v180 = vshrl.u32 %v179, 7
  %v181 = vsub.s32 0, %v180
  %v182 = vrot.slane %v67, %v181
  %183 = vset.pattern.permute.xlu0 8
  %184 = vperm.xlu0 %183, %v182
  %v185 = vpop.permute.xlu0 %184
  %v187 = vmul.f32 %v17, %v185
  %v188 = vmul.f32 %v18, %v185
  %v189 = vmul.f32 %v19, %v185
  %v190 = vmul.f32 %v20, %v185
  %v191 = vmul.f32 %v21, %v185
  %v192 = vmul.f32 %v22, %v185
  %v193 = vmul.f32 %v23, %v185
  %v194 = vmul.f32 %v24, %v185
  %v195 = vmul.f32 %v25, %v185
  %v196 = vmul.f32 %v26, %v185
  %v197 = vmul.f32 %v27, %v185
  %v198 = vmul.f32 %v28, %v185
  %v199 = vmul.f32 %v29, %v185
  %v200 = vmul.f32 %v30, %v185
  %v201 = vmul.f32 %v31, %v185
  %v202 = vmul.f32 %v32, %v185
  %v203 = vmul.f32 %v33, %v185
  %v204 = vmul.f32 %v34, %v185
  %v205 = vmul.f32 %v35, %v185
  %v206 = vmul.f32 %v36, %v185
  %vm227 = vcmask 1042432
  %v228 = vrot.slane %v187, 5
  %v229 = vrot.slane %v188, 5
  %v230 = vsel %vm227, %v228, %v229
  %v231 = vrot.slane %v189, 5
  %v232 = vrot.slane %v190, 5
  %v233 = vsel %vm227, %v231, %v232
  %v234 = vrot.slane %v191, 5
  %v235 = vrot.slane %v192, 5
  %v236 = vsel %vm227, %v234, %v235
  %v237 = vrot.slane %v193, 5
  %v238 = vrot.slane %v194, 5
  %v239 = vsel %vm227, %v237, %v238
  %v240 = vrot.slane %v195, 5
  %v241 = vrot.slane %v196, 5
  %v242 = vsel %vm227, %v240, %v241
  %v243 = vrot.slane %v197, 5
  %v244 = vrot.slane %v198, 5
  %v245 = vsel %vm227, %v243, %v244
  %v246 = vrot.slane %v199, 5
  %v247 = vrot.slane %v200, 5
  %v248 = vsel %vm227, %v246, %v247
  %v249 = vrot.slane %v201, 5
  %v250 = vrot.slane %v202, 5
  %v251 = vsel %vm227, %v249, %v250
  %v252 = vrot.slane %v203, 5
  %v253 = vrot.slane %v204, 5
  %v254 = vsel %vm227, %v252, %v253
  %v255 = vrot.slane %v205, 5
  %v256 = vrot.slane %v206, 5
  %v257 = vsel %vm227, %v255, %v256
  %v268 = vadd.f32 %v168, %v230
  %v269 = vadd.f32 %v169, %v233
  %v270 = vadd.f32 %v170, %v236
  %v271 = vadd.f32 %v171, %v239
  %v272 = vadd.f32 %v172, %v242
  %v273 = vadd.f32 %v173, %v245
  %v274 = vadd.f32 %v174, %v248
  %v275 = vadd.f32 %v175, %v251
  %v276 = vadd.f32 %v176, %v254
  %v277 = vadd.f32 %v177, %v257
  %v278 = vmul.f32 %v268, 0.2
  %v279 = vmul.f32 %v269, 0.2
  %v280 = vmul.f32 %v270, 0.2
  %v281 = vmul.f32 %v271, 0.2
  %v282 = vmul.f32 %v272, 0.2
  %v283 = vmul.f32 %v273, 0.2
  %v284 = vmul.f32 %v274, 0.2
  %v285 = vmul.f32 %v275, 0.2
  %v286 = vmul.f32 %v276, 0.2
  %v287 = vmul.f32 %v277, 0.2
  %v288 = vmax.f32 %v268, %v278
  %v289 = vmax.f32 %v269, %v279
  %v290 = vmax.f32 %v270, %v280
  %v291 = vmax.f32 %v271, %v281
  %v292 = vmax.f32 %v272, %v282
  %v293 = vmax.f32 %v273, %v283
  %v294 = vmax.f32 %v274, %v284
  %v295 = vmax.f32 %v275, %v285
  %v296 = vmax.f32 %v276, %v286
  %v297 = vmax.f32 %v277, %v287
  %v298 = vadd.f32 %v57, %v57
  %v299 = vadd.f32 %v58, %v58
  %v300 = vadd.f32 %v59, %v59
  %v301 = vadd.f32 %v60, %v60
  %v302 = vadd.f32 %v61, %v61
  %v303 = vadd.f32 %v62, %v62
  %v304 = vadd.f32 %v63, %v63
  %v305 = vadd.f32 %v64, %v64
  %v306 = vadd.f32 %v65, %v65
  %v307 = vadd.f32 %v66, %v66
  %v308 = vmul.f32 %v298, 0.2
  %v309 = vmul.f32 %v299, 0.2
  %v310 = vmul.f32 %v300, 0.2
  %v311 = vmul.f32 %v301, 0.2
  %v312 = vmul.f32 %v302, 0.2
  %v313 = vmul.f32 %v303, 0.2
  %v314 = vmul.f32 %v304, 0.2
  %v315 = vmul.f32 %v305, 0.2
  %v316 = vmul.f32 %v306, 0.2
  %v317 = vmul.f32 %v307, 0.2
  %v318 = vmax.f32 %v298, %v308
  %v319 = vmax.f32 %v299, %v309
  %v320 = vmax.f32 %v300, %v310
  %v321 = vmax.f32 %v301, %v311
  %v322 = vmax.f32 %v302, %v312
  %v323 = vmax.f32 %v303, %v313
  %v324 = vmax.f32 %v304, %v314
  %v325 = vmax.f32 %v305, %v315
  %v326 = vmax.f32 %v306, %v316
  %v327 = vmax.f32 %v307, %v317
  %vm328 = vcmp.gt.f32.partialorder %v17, 0.5
  %vm329 = vcmp.gt.f32.partialorder %v19, 0.5
  %vm330 = vcmp.gt.f32.partialorder %v21, 0.5
  %vm331 = vcmp.gt.f32.partialorder %v23, 0.5
  %vm332 = vcmp.gt.f32.partialorder %v25, 0.5
  %vm333 = vcmp.gt.f32.partialorder %v27, 0.5
  %vm334 = vcmp.gt.f32.partialorder %v29, 0.5
  %vm335 = vcmp.gt.f32.partialorder %v31, 0.5
  %vm336 = vcmp.gt.f32.partialorder %v33, 0.5
  %vm337 = vcmp.gt.f32.partialorder %v35, 0.5
  %v338 = vsel %vm328, %v288, -inf
  %v339 = vsel %vm329, %v289, -inf
  %v340 = vsel %vm330, %v290, -inf
  %v341 = vsel %vm331, %v291, -inf
  %v342 = vsel %vm332, %v292, -inf
  %v343 = vsel %vm333, %v293, -inf
  %v344 = vsel %vm334, %v294, -inf
  %v345 = vsel %vm335, %v295, -inf
  %v346 = vsel %vm336, %v296, -inf
  %v347 = vsel %vm337, %v297, -inf
  %vm348 = vcmask 77824
  %v349 = vsel %vm348, %v338, -inf
  %350 = vmax.xlane.f32.xlu0 %v349
  %v351 = vpop.xlane.xlu0 %350
  %v352 = vsel %vm348, %v339, -inf
  %353 = vmax.xlane.f32.xlu0 %v352
  %v354 = vpop.xlane.xlu0 %353
  %v355 = vsel %vm348, %v340, -inf
  %356 = vmax.xlane.f32.xlu0 %v355
  %v357 = vpop.xlane.xlu0 %356
  %v358 = vsel %vm348, %v341, -inf
  %359 = vmax.xlane.f32.xlu0 %v358
  %v360 = vpop.xlane.xlu0 %359
  %v361 = vsel %vm348, %v342, -inf
  %362 = vmax.xlane.f32.xlu0 %v361
  %v363 = vpop.xlane.xlu0 %362
  %v364 = vsel %vm348, %v343, -inf
  %365 = vmax.xlane.f32.xlu0 %v364
  %v366 = vpop.xlane.xlu0 %365
  %v367 = vsel %vm348, %v344, -inf
  %368 = vmax.xlane.f32.xlu0 %v367
  %v369 = vpop.xlane.xlu0 %368
  %v370 = vsel %vm348, %v345, -inf
  %371 = vmax.xlane.f32.xlu0 %v370
  %v372 = vpop.xlane.xlu0 %371
  %v373 = vsel %vm348, %v346, -inf
  %374 = vmax.xlane.f32.xlu0 %v373
  %v375 = vpop.xlane.xlu0 %374
  %v376 = vsel %vm348, %v347, -inf
  %377 = vmax.xlane.f32.xlu0 %v376
  %v378 = vpop.xlane.xlu0 %377
  %v379 = vmax.f32 %v351, %v318
  %v380 = vmax.f32 %v354, %v319
  %v381 = vmax.f32 %v357, %v320
  %v382 = vmax.f32 %v360, %v321
  %v383 = vmax.f32 %v363, %v322
  %v384 = vmax.f32 %v366, %v323
  %v385 = vmax.f32 %v369, %v324
  %v386 = vmax.f32 %v372, %v325
  %v387 = vmax.f32 %v375, %v326
  %v388 = vmax.f32 %v378, %v327
  %390 = vset.pattern.permute.xlu0 8
  %391 = vperm.xlu0 %390, %v379
  %v392 = vpop.permute.xlu0 %391
  %395 = vset.pattern.permute.xlu0 8
  %396 = vperm.xlu0 %395, %v380
  %v397 = vpop.permute.xlu0 %396
  %400 = vset.pattern.permute.xlu0 8
  %401 = vperm.xlu0 %400, %v381
  %v402 = vpop.permute.xlu0 %401
  %405 = vset.pattern.permute.xlu0 8
  %406 = vperm.xlu0 %405, %v382
  %v407 = vpop.permute.xlu0 %406
  %410 = vset.pattern.permute.xlu0 8
  %411 = vperm.xlu0 %410, %v383
  %v412 = vpop.permute.xlu0 %411
  %415 = vset.pattern.permute.xlu0 8
  %416 = vperm.xlu0 %415, %v384
  %v417 = vpop.permute.xlu0 %416
  %420 = vset.pattern.permute.xlu0 8
  %421 = vperm.xlu0 %420, %v385
  %v422 = vpop.permute.xlu0 %421
  %425 = vset.pattern.permute.xlu0 8
  %426 = vperm.xlu0 %425, %v386
  %v427 = vpop.permute.xlu0 %426
  %430 = vset.pattern.permute.xlu0 8
  %431 = vperm.xlu0 %430, %v387
  %v432 = vpop.permute.xlu0 %431
  %435 = vset.pattern.permute.xlu0 8
  %436 = vperm.xlu0 %435, %v388
  %v437 = vpop.permute.xlu0 %436
  %v439 = vsub.f32 %v338, %v392
  %v440 = vsub.f32 %v339, %v397
  %v441 = vsub.f32 %v340, %v402
  %v442 = vsub.f32 %v341, %v407
  %v443 = vsub.f32 %v342, %v412
  %v444 = vsub.f32 %v343, %v417
  %v445 = vsub.f32 %v344, %v422
  %v446 = vsub.f32 %v345, %v427
  %v447 = vsub.f32 %v346, %v432
  %v448 = vsub.f32 %v347, %v437
  %v449 = vmul.f32 %v439, 1.442695
  %v450 = vpow.pop %v449
  %v451 = vmul.f32 %v440, 1.442695
  %v452 = vpow.pop %v451
  %v453 = vmul.f32 %v441, 1.442695
  %v454 = vpow.pop %v453
  %v455 = vmul.f32 %v442, 1.442695
  %v456 = vpow.pop %v455
  %v457 = vmul.f32 %v443, 1.442695
  %v458 = vpow.pop %v457
  %v459 = vmul.f32 %v444, 1.442695
  %v460 = vpow.pop %v459
  %v461 = vmul.f32 %v445, 1.442695
  %v462 = vpow.pop %v461
  %v463 = vmul.f32 %v446, 1.442695
  %v464 = vpow.pop %v463
  %v465 = vmul.f32 %v447, 1.442695
  %v466 = vpow.pop %v465
  %v467 = vmul.f32 %v448, 1.442695
  %v468 = vpow.pop %v467
  %v469 = vsub.f32 %v318, %v379
  %v470 = vsub.f32 %v319, %v380
  %v471 = vsub.f32 %v320, %v381
  %v472 = vsub.f32 %v321, %v382
  %v473 = vsub.f32 %v322, %v383
  %v474 = vsub.f32 %v323, %v384
  %v475 = vsub.f32 %v324, %v385
  %v476 = vsub.f32 %v325, %v386
  %v477 = vsub.f32 %v326, %v387
  %v478 = vsub.f32 %v327, %v388
  %v479 = vmul.f32 %v469, 1.442695
  %v480 = vpow.pop %v479
  %v481 = vmul.f32 %v470, 1.442695
  %v482 = vpow.pop %v481
  %v483 = vmul.f32 %v471, 1.442695
  %v484 = vpow.pop %v483
  %v485 = vmul.f32 %v472, 1.442695
  %v486 = vpow.pop %v485
  %v487 = vmul.f32 %v473, 1.442695
  %v488 = vpow.pop %v487
  %v489 = vmul.f32 %v474, 1.442695
  %v490 = vpow.pop %v489
  %v491 = vmul.f32 %v475, 1.442695
  %v492 = vpow.pop %v491
  %v493 = vmul.f32 %v476, 1.442695
  %v494 = vpow.pop %v493
  %v495 = vmul.f32 %v477, 1.442695
  %v496 = vpow.pop %v495
  %v497 = vmul.f32 %v478, 1.442695
  %v498 = vpow.pop %v497
  %v499 = vsel %vm348, %v450, 0.0
  %500 = vadd.xlane.f32.xlu0 %v499
  %v501 = vpop.xlane.xlu0 %500
  %v502 = vsel %vm348, %v452, 0.0
  %503 = vadd.xlane.f32.xlu0 %v502
  %v504 = vpop.xlane.xlu0 %503
  %v505 = vsel %vm348, %v454, 0.0
  %506 = vadd.xlane.f32.xlu0 %v505
  %v507 = vpop.xlane.xlu0 %506
  %v508 = vsel %vm348, %v456, 0.0
  %509 = vadd.xlane.f32.xlu0 %v508
  %v510 = vpop.xlane.xlu0 %509
  %v511 = vsel %vm348, %v458, 0.0
  %512 = vadd.xlane.f32.xlu0 %v511
  %v513 = vpop.xlane.xlu0 %512
  %v514 = vsel %vm348, %v460, 0.0
  %515 = vadd.xlane.f32.xlu0 %v514
  %v516 = vpop.xlane.xlu0 %515
  %v517 = vsel %vm348, %v462, 0.0
  %518 = vadd.xlane.f32.xlu0 %v517
  %v519 = vpop.xlane.xlu0 %518
  %v520 = vsel %vm348, %v464, 0.0
  %521 = vadd.xlane.f32.xlu0 %v520
  %v522 = vpop.xlane.xlu0 %521
  %v523 = vsel %vm348, %v466, 0.0
  %524 = vadd.xlane.f32.xlu0 %v523
  %v525 = vpop.xlane.xlu0 %524
  %v526 = vsel %vm348, %v468, 0.0
  %527 = vadd.xlane.f32.xlu0 %v526
  %v528 = vpop.xlane.xlu0 %527
  %v529 = vadd.f32 %v501, %v480
  %v530 = vadd.f32 %v504, %v482
  %v531 = vadd.f32 %v507, %v484
  %v532 = vadd.f32 %v510, %v486
  %v533 = vadd.f32 %v513, %v488
  %v534 = vadd.f32 %v516, %v490
  %v535 = vadd.f32 %v519, %v492
  %v536 = vadd.f32 %v522, %v494
  %v537 = vadd.f32 %v525, %v496
  %v538 = vadd.f32 %v528, %v498
  %v539 = vrcp.pop %v529
  %v540 = vmul.f32 1.0, %v539
  %v541 = vrcp.pop %v530
  %v542 = vmul.f32 1.0, %v541
  %v543 = vrcp.pop %v531
  %v544 = vmul.f32 1.0, %v543
  %v545 = vrcp.pop %v532
  %v546 = vmul.f32 1.0, %v545
  %v547 = vrcp.pop %v533
  %v548 = vmul.f32 1.0, %v547
  %v549 = vrcp.pop %v534
  %v550 = vmul.f32 1.0, %v549
  %v551 = vrcp.pop %v535
  %v552 = vmul.f32 1.0, %v551
  %v553 = vrcp.pop %v536
  %v554 = vmul.f32 1.0, %v553
  %v555 = vrcp.pop %v537
  %v556 = vmul.f32 1.0, %v555
  %v557 = vrcp.pop %v538
  %v558 = vmul.f32 1.0, %v557
  %560 = vset.pattern.permute.xlu0 8
  %561 = vperm.xlu0 %560, %v540
  %v562 = vpop.permute.xlu0 %561
  %565 = vset.pattern.permute.xlu0 8
  %566 = vperm.xlu0 %565, %v542
  %v567 = vpop.permute.xlu0 %566
  %570 = vset.pattern.permute.xlu0 8
  %571 = vperm.xlu0 %570, %v544
  %v572 = vpop.permute.xlu0 %571
  %575 = vset.pattern.permute.xlu0 8
  %576 = vperm.xlu0 %575, %v546
  %v577 = vpop.permute.xlu0 %576
  %580 = vset.pattern.permute.xlu0 8
  %581 = vperm.xlu0 %580, %v548
  %v582 = vpop.permute.xlu0 %581
  %585 = vset.pattern.permute.xlu0 8
  %586 = vperm.xlu0 %585, %v550
  %v587 = vpop.permute.xlu0 %586
  %590 = vset.pattern.permute.xlu0 8
  %591 = vperm.xlu0 %590, %v552
  %v592 = vpop.permute.xlu0 %591
  %595 = vset.pattern.permute.xlu0 8
  %596 = vperm.xlu0 %595, %v554
  %v597 = vpop.permute.xlu0 %596
  %600 = vset.pattern.permute.xlu0 8
  %601 = vperm.xlu0 %600, %v556
  %v602 = vpop.permute.xlu0 %601
  %605 = vset.pattern.permute.xlu0 8
  %606 = vperm.xlu0 %605, %v558
  %v607 = vpop.permute.xlu0 %606
  %v609 = vmul.f32 %v450, %v562
  %v610 = vmul.f32 %v452, %v567
  %v611 = vmul.f32 %v454, %v572
  %v612 = vmul.f32 %v456, %v577
  %v613 = vmul.f32 %v458, %v582
  %v614 = vmul.f32 %v460, %v587
  %v615 = vmul.f32 %v462, %v592
  %v616 = vmul.f32 %v464, %v597
  %v617 = vmul.f32 %v466, %v602
  %v618 = vmul.f32 %v468, %v607
  %v619 = vmul.f32 %v480, %v540
  %v620 = vmul.f32 %v482, %v542
  %v621 = vmul.f32 %v484, %v544
  %v622 = vmul.f32 %v486, %v546
  %v623 = vmul.f32 %v488, %v548
  %v624 = vmul.f32 %v490, %v550
  %v625 = vmul.f32 %v492, %v552
  %v626 = vmul.f32 %v494, %v554
  %v627 = vmul.f32 %v496, %v556
  %v628 = vmul.f32 %v498, %v558
  %v639 = vrot.slane %v609, 3
  %v640 = vrot.slane %v610, 3
  %v641 = vrot.slane %v611, 3
  %v642 = vrot.slane %v612, 3
  %v643 = vrot.slane %v613, 3
  %v644 = vrot.slane %v614, 3
  %v645 = vrot.slane %v615, 3
  %v646 = vrot.slane %v616, 3
  %v647 = vrot.slane %v617, 3
  %v648 = vrot.slane %v618, 3
  %v659 = vmul.f32 %v17, %v639
  %v660 = vmul.f32 %v18, %v639
  %v661 = vmul.f32 %v19, %v640
  %v662 = vmul.f32 %v20, %v640
  %v663 = vmul.f32 %v21, %v641
  %v664 = vmul.f32 %v22, %v641
  %v665 = vmul.f32 %v23, %v642
  %v666 = vmul.f32 %v24, %v642
  %v667 = vmul.f32 %v25, %v643
  %v668 = vmul.f32 %v26, %v643
  %v669 = vmul.f32 %v27, %v644
  %v670 = vmul.f32 %v28, %v644
  %v671 = vmul.f32 %v29, %v645
  %v672 = vmul.f32 %v30, %v645
  %v673 = vmul.f32 %v31, %v646
  %v674 = vmul.f32 %v32, %v646
  %v675 = vmul.f32 %v33, %v647
  %v676 = vmul.f32 %v34, %v647
  %v677 = vmul.f32 %v35, %v648
  %v678 = vmul.f32 %v36, %v648
  %vm679 = vcmask 80901
  %v680 = vsel %vm679, %v659, 0.0
  %681 = vadd.xlane.f32.xlu0 %v680
  %v682 = vpop.xlane.xlu0 %681
  %vm683 = vcmask 74752
  %v684 = vsel %vm683, %v660, 0.0
  %685 = vadd.xlane.f32.xlu0 %v684
  %v686 = vpop.xlane.xlu0 %685
  %v687 = vsel %vm679, %v661, 0.0
  %688 = vadd.xlane.f32.xlu0 %v687
  %v689 = vpop.xlane.xlu0 %688
  %v690 = vsel %vm683, %v662, 0.0
  %691 = vadd.xlane.f32.xlu0 %v690
  %v692 = vpop.xlane.xlu0 %691
  %v693 = vsel %vm679, %v663, 0.0
  %694 = vadd.xlane.f32.xlu0 %v693
  %v695 = vpop.xlane.xlu0 %694
  %v696 = vsel %vm683, %v664, 0.0
  %697 = vadd.xlane.f32.xlu0 %v696
  %v698 = vpop.xlane.xlu0 %697
  %v699 = vsel %vm679, %v665, 0.0
  %700 = vadd.xlane.f32.xlu0 %v699
  %v701 = vpop.xlane.xlu0 %700
  %v702 = vsel %vm683, %v666, 0.0
  %703 = vadd.xlane.f32.xlu0 %v702
  %v704 = vpop.xlane.xlu0 %703
  %v705 = vsel %vm679, %v667, 0.0
  %706 = vadd.xlane.f32.xlu0 %v705
  %v707 = vpop.xlane.xlu0 %706
  %v708 = vsel %vm683, %v668, 0.0
  %709 = vadd.xlane.f32.xlu0 %v708
  %v710 = vpop.xlane.xlu0 %709
  %v711 = vsel %vm679, %v669, 0.0
  %712 = vadd.xlane.f32.xlu0 %v711
  %v713 = vpop.xlane.xlu0 %712
  %v714 = vsel %vm683, %v670, 0.0
  %715 = vadd.xlane.f32.xlu0 %v714
  %v716 = vpop.xlane.xlu0 %715
  %v717 = vsel %vm679, %v671, 0.0
  %718 = vadd.xlane.f32.xlu0 %v717
  %v719 = vpop.xlane.xlu0 %718
  %v720 = vsel %vm683, %v672, 0.0
  %721 = vadd.xlane.f32.xlu0 %v720
  %v722 = vpop.xlane.xlu0 %721
  %v723 = vsel %vm679, %v673, 0.0
  %724 = vadd.xlane.f32.xlu0 %v723
  %v725 = vpop.xlane.xlu0 %724
  %v726 = vsel %vm683, %v674, 0.0
  %727 = vadd.xlane.f32.xlu0 %v726
  %v728 = vpop.xlane.xlu0 %727
  %v729 = vsel %vm679, %v675, 0.0
  %730 = vadd.xlane.f32.xlu0 %v729
  %v731 = vpop.xlane.xlu0 %730
  %v732 = vsel %vm683, %v676, 0.0
  %733 = vadd.xlane.f32.xlu0 %v732
  %v734 = vpop.xlane.xlu0 %733
  %v735 = vsel %vm679, %v677, 0.0
  %736 = vadd.xlane.f32.xlu0 %v735
  %v737 = vpop.xlane.xlu0 %736
  %v738 = vsel %vm683, %v678, 0.0
  %739 = vadd.xlane.f32.xlu0 %v738
  %v740 = vpop.xlane.xlu0 %739
  %v742 = vmul.f32 %v682, %v182
  %v743 = vmul.f32 %v686, %v182
  %v744 = vmul.f32 %v689, %v182
  %v745 = vmul.f32 %v692, %v182
  %v746 = vmul.f32 %v695, %v182
  %v747 = vmul.f32 %v698, %v182
  %v748 = vmul.f32 %v701, %v182
  %v749 = vmul.f32 %v704, %v182
  %v750 = vmul.f32 %v707, %v182
  %v751 = vmul.f32 %v710, %v182
  %v752 = vmul.f32 %v713, %v182
  %v753 = vmul.f32 %v716, %v182
  %v754 = vmul.f32 %v719, %v182
  %v755 = vmul.f32 %v722, %v182
  %v756 = vmul.f32 %v725, %v182
  %v757 = vmul.f32 %v728, %v182
  %v758 = vmul.f32 %v731, %v182
  %v759 = vmul.f32 %v734, %v182
  %v760 = vmul.f32 %v737, %v182
  %v761 = vmul.f32 %v740, %v182
  %v764 = vrot.slane %v742, 5
  %v765 = vrot.slane %v743, 5
  %v766 = vsel %vm227, %v764, %v765
  %vm768 = vcmask 80896
  %v769 = vsel %vm768, %v609, 0
  %vm771 = vcmask 1041408
  %v773 = vsel %vm771, %v38, 0
  %775 = vmatprep.subr.mxu0 0.0
  %776 = vmatpush1.msra.mxu0 %v37
  %777 = vmatprep.subr.mxu0 0.0
  %778 = vmatpush1.msra.mxu0 %v773
  %779 = vmatprep.subr.mxu0 0.0
  %780 = vmatpush1.msra.mxu0 0.0
  %781 = vmatprep.subr.mxu0 0.0
  %782 = vmatpush1.msra.mxu0 0.0
  %783 = vmatprep.subr.mxu0 0.0
  %784 = vmatpush1.msra.mxu0 0.0
  %785 = vmatprep.subr.mxu0 0.0
  %786 = vmatpush1.msra.mxu0 0.0
  %787 = vmatprep.subr.mxu0 0.0
  %788 = vmatpush1.msra.mxu0 0.0
  %789 = vmatprep.subr.mxu0 0.0
  %790 = vmatpush1.msra.mxu0 0.0
  %791 = vmatprep.subr.mxu0 0.0
  %792 = vmatpush1.msra.mxu0 0.0
  %793 = vmatprep.subr.mxu0 0.0
  %794 = vmatpush1.msra.mxu0 0.0
  %795 = vmatprep.subr.mxu0 0.0
  %796 = vmatpush1.msra.mxu0 0.0
  %797 = vmatprep.subr.mxu0 0.0
  %798 = vmatpush1.msra.mxu0 0.0
  %799 = vmatprep.subr.mxu0 0.0
  %800 = vmatpush1.msra.mxu0 0.0
  %801 = vmatprep.subr.mxu0 0.0
  %802 = vmatpush1.msra.mxu0 0.0
  %803 = vmatprep.subr.mxu0 0.0
  %804 = vmatpush1.msra.mxu0 0.0
  %805 = vmatprep.subr.mxu0 0.0
  %806 = vmatpush1.msra.mxu0 0.0
  %807 = vmatprep.subr.mxu0 0.0
  %808 = vmatpush1.msra.mxu0 0.0
  %809 = vmatprep.subr.mxu0 0.0
  %810 = vmatpush1.msra.mxu0 0.0
  %811 = vmatprep.subr.mxu0 0.0
  %812 = vmatpush1.msra.mxu0 0.0
  %813 = vmatprep.subr.mxu0 0.0
  %814 = vmatpush1.msra.mxu0 0.0
  %815 = vmatprep.subr.mxu0 0.0
  %816 = vmatpush1.msra.mxu0 0.0
  %817 = vmatprep.subr.mxu0 0.0
  %818 = vmatpush1.msra.mxu0 0.0
  %819 = vmatprep.subr.mxu0 0.0
  %820 = vmatpush1.msra.mxu0 0.0
  %821 = vmatprep.subr.mxu0 0.0
  %822 = vmatpush1.msra.mxu0 0.0
  %823 = vmatprep.subr.mxu0 0.0
  %824 = vmatpush1.msra.mxu0 0.0
  %825 = vmatprep.subr.mxu0 0.0
  %826 = vmatpush1.msra.mxu0 0.0
  %827 = vmatprep.subr.mxu0 0.0
  %828 = vmatpush1.msra.mxu0 0.0
  %829 = vmatprep.subr.mxu0 0.0
  %830 = vmatpush1.msra.mxu0 0.0
  %831 = vmatprep.subr.mxu0 0.0
  %832 = vmatpush1.msra.mxu0 0.0
  %833 = vmatprep.subr.mxu0 0.0
  %834 = vmatpush1.msra.mxu0 0.0
  %835 = vmatprep.subr.mxu0 0.0
  %836 = vmatpush1.msra.mxu0 0.0
  %837 = vmatprep.subr.mxu0 0.0
  %838 = vmatpush1.msra.mxu0 0.0
  %839 = vmatprep.mubr.f32.mxu0 0.0
  %840 = vmatmul.mubr.f32.gmra.mrb[0].mxu0 %v769
  %v841 = vpop.f32.mrb[0].mxu0
  %v842 = vadd.f32 %v766, %v841
  %v843 = vpop.f32.mrb[0].mxu0
  %844 = vdwg.mxu0
  %v847 = vrot.slane %v744, 5
  %v848 = vrot.slane %v745, 5
  %v849 = vsel %vm227, %v847, %v848
  %v851 = vsel %vm768, %v610, 0
  %v854 = vsel %vm771, %v40, 0
  %856 = vmatprep.subr.mxu0 0.0
  %857 = vmatpush1.msra.mxu0 %v39
  %858 = vmatprep.subr.mxu0 0.0
  %859 = vmatpush1.msra.mxu0 %v854
  %860 = vmatprep.subr.mxu0 0.0
  %861 = vmatpush1.msra.mxu0 0.0
  %862 = vmatprep.subr.mxu0 0.0
  %863 = vmatpush1.msra.mxu0 0.0
  %864 = vmatprep.subr.mxu0 0.0
  %865 = vmatpush1.msra.mxu0 0.0
  %866 = vmatprep.subr.mxu0 0.0
  %867 = vmatpush1.msra.mxu0 0.0
  %868 = vmatprep.subr.mxu0 0.0
  %869 = vmatpush1.msra.mxu0 0.0
  %870 = vmatprep.subr.mxu0 0.0
  %871 = vmatpush1.msra.mxu0 0.0
  %872 = vmatprep.subr.mxu0 0.0
  %873 = vmatpush1.msra.mxu0 0.0
  %874 = vmatprep.subr.mxu0 0.0
  %875 = vmatpush1.msra.mxu0 0.0
  %876 = vmatprep.subr.mxu0 0.0
  %877 = vmatpush1.msra.mxu0 0.0
  %878 = vmatprep.subr.mxu0 0.0
  %879 = vmatpush1.msra.mxu0 0.0
  %880 = vmatprep.subr.mxu0 0.0
  %881 = vmatpush1.msra.mxu0 0.0
  %882 = vmatprep.subr.mxu0 0.0
  %883 = vmatpush1.msra.mxu0 0.0
  %884 = vmatprep.subr.mxu0 0.0
  %885 = vmatpush1.msra.mxu0 0.0
  %886 = vmatprep.subr.mxu0 0.0
  %887 = vmatpush1.msra.mxu0 0.0
  %888 = vmatprep.subr.mxu0 0.0
  %889 = vmatpush1.msra.mxu0 0.0
  %890 = vmatprep.subr.mxu0 0.0
  %891 = vmatpush1.msra.mxu0 0.0
  %892 = vmatprep.subr.mxu0 0.0
  %893 = vmatpush1.msra.mxu0 0.0
  %894 = vmatprep.subr.mxu0 0.0
  %895 = vmatpush1.msra.mxu0 0.0
  %896 = vmatprep.subr.mxu0 0.0
  %897 = vmatpush1.msra.mxu0 0.0
  %898 = vmatprep.subr.mxu0 0.0
  %899 = vmatpush1.msra.mxu0 0.0
  %900 = vmatprep.subr.mxu0 0.0
  %901 = vmatpush1.msra.mxu0 0.0
  %902 = vmatprep.subr.mxu0 0.0
  %903 = vmatpush1.msra.mxu0 0.0
  %904 = vmatprep.subr.mxu0 0.0
  %905 = vmatpush1.msra.mxu0 0.0
  %906 = vmatprep.subr.mxu0 0.0
  %907 = vmatpush1.msra.mxu0 0.0
  %908 = vmatprep.subr.mxu0 0.0
  %909 = vmatpush1.msra.mxu0 0.0
  %910 = vmatprep.subr.mxu0 0.0
  %911 = vmatpush1.msra.mxu0 0.0
  %912 = vmatprep.subr.mxu0 0.0
  %913 = vmatpush1.msra.mxu0 0.0
  %914 = vmatprep.subr.mxu0 0.0
  %915 = vmatpush1.msra.mxu0 0.0
  %916 = vmatprep.subr.mxu0 0.0
  %917 = vmatpush1.msra.mxu0 0.0
  %918 = vmatprep.subr.mxu0 0.0
  %919 = vmatpush1.msra.mxu0 0.0
  %920 = vmatprep.mubr.f32.mxu0 0.0
  %921 = vmatmul.mubr.f32.gmra.mrb[0].mxu0 %v851
  %v922 = vpop.f32.mrb[0].mxu0
  %v923 = vadd.f32 %v849, %v922
  %v924 = vpop.f32.mrb[0].mxu0
  %925 = vdwg.mxu0
  %v928 = vrot.slane %v746, 5
  %v929 = vrot.slane %v747, 5
  %v930 = vsel %vm227, %v928, %v929
  %v932 = vsel %vm768, %v611, 0
  %v935 = vsel %vm771, %v42, 0
  %937 = vmatprep.subr.mxu0 0.0
  %938 = vmatpush1.msra.mxu0 %v41
  %939 = vmatprep.subr.mxu0 0.0
  %940 = vmatpush1.msra.mxu0 %v935
  %941 = vmatprep.subr.mxu0 0.0
  %942 = vmatpush1.msra.mxu0 0.0
  %943 = vmatprep.subr.mxu0 0.0
  %944 = vmatpush1.msra.mxu0 0.0
  %945 = vmatprep.subr.mxu0 0.0
  %946 = vmatpush1.msra.mxu0 0.0
  %947 = vmatprep.subr.mxu0 0.0
  %948 = vmatpush1.msra.mxu0 0.0
  %949 = vmatprep.subr.mxu0 0.0
  %950 = vmatpush1.msra.mxu0 0.0
  %951 = vmatprep.subr.mxu0 0.0
  %952 = vmatpush1.msra.mxu0 0.0
  %953 = vmatprep.subr.mxu0 0.0
  %954 = vmatpush1.msra.mxu0 0.0
  %955 = vmatprep.subr.mxu0 0.0
  %956 = vmatpush1.msra.mxu0 0.0
  %957 = vmatprep.subr.mxu0 0.0
  %958 = vmatpush1.msra.mxu0 0.0
  %959 = vmatprep.subr.mxu0 0.0
  %960 = vmatpush1.msra.mxu0 0.0
  %961 = vmatprep.subr.mxu0 0.0
  %962 = vmatpush1.msra.mxu0 0.0
  %963 = vmatprep.subr.mxu0 0.0
  %964 = vmatpush1.msra.mxu0 0.0
  %965 = vmatprep.subr.mxu0 0.0
  %966 = vmatpush1.msra.mxu0 0.0
  %967 = vmatprep.subr.mxu0 0.0
  %968 = vmatpush1.msra.mxu0 0.0
  %969 = vmatprep.subr.mxu0 0.0
  %970 = vmatpush1.msra.mxu0 0.0
  %971 = vmatprep.subr.mxu0 0.0
  %972 = vmatpush1.msra.mxu0 0.0
  %973 = vmatprep.subr.mxu0 0.0
  %974 = vmatpush1.msra.mxu0 0.0
  %975 = vmatprep.subr.mxu0 0.0
  %976 = vmatpush1.msra.mxu0 0.0
  %977 = vmatprep.subr.mxu0 0.0
  %978 = vmatpush1.msra.mxu0 0.0
  %979 = vmatprep.subr.mxu0 0.0
  %980 = vmatpush1.msra.mxu0 0.0
  %981 = vmatprep.subr.mxu0 0.0
  %982 = vmatpush1.msra.mxu0 0.0
  %983 = vmatprep.subr.mxu0 0.0
  %984 = vmatpush1.msra.mxu0 0.0
  %985 = vmatprep.subr.mxu0 0.0
  %986 = vmatpush1.msra.mxu0 0.0
  %987 = vmatprep.subr.mxu0 0.0
  %988 = vmatpush1.msra.mxu0 0.0
  %989 = vmatprep.subr.mxu0 0.0
  %990 = vmatpush1.msra.mxu0 0.0
  %991 = vmatprep.subr.mxu0 0.0
  %992 = vmatpush1.msra.mxu0 0.0
  %993 = vmatprep.subr.mxu0 0.0
  %994 = vmatpush1.msra.mxu0 0.0
  %995 = vmatprep.subr.mxu0 0.0
  %996 = vmatpush1.msra.mxu0 0.0
  %997 = vmatprep.subr.mxu0 0.0
  %998 = vmatpush1.msra.mxu0 0.0
  %999 = vmatprep.subr.mxu0 0.0
  %1000 = vmatpush1.msra.mxu0 0.0
  %1001 = vmatprep.mubr.f32.mxu0 0.0
  %1002 = vmatmul.mubr.f32.gmra.mrb[0].mxu0 %v932
  %v1003 = vpop.f32.mrb[0].mxu0
  %v1004 = vadd.f32 %v930, %v1003
  %v1005 = vpop.f32.mrb[0].mxu0
  %1006 = vdwg.mxu0
  %v1009 = vrot.slane %v748, 5
  %v1010 = vrot.slane %v749, 5
  %v1011 = vsel %vm227, %v1009, %v1010
  %v1013 = vsel %vm768, %v612, 0
  %v1016 = vsel %vm771, %v44, 0
  %1018 = vmatprep.subr.mxu0 0.0
  %1019 = vmatpush1.msra.mxu0 %v43
  %1020 = vmatprep.subr.mxu0 0.0
  %1021 = vmatpush1.msra.mxu0 %v1016
  %1022 = vmatprep.subr.mxu0 0.0
  %1023 = vmatpush1.msra.mxu0 0.0
  %1024 = vmatprep.subr.mxu0 0.0
  %1025 = vmatpush1.msra.mxu0 0.0
  %1026 = vmatprep.subr.mxu0 0.0
  %1027 = vmatpush1.msra.mxu0 0.0
  %1028 = vmatprep.subr.mxu0 0.0
  %1029 = vmatpush1.msra.mxu0 0.0
  %1030 = vmatprep.subr.mxu0 0.0
  %1031 = vmatpush1.msra.mxu0 0.0
  %1032 = vmatprep.subr.mxu0 0.0
  %1033 = vmatpush1.msra.mxu0 0.0
  %1034 = vmatprep.subr.mxu0 0.0
  %1035 = vmatpush1.msra.mxu0 0.0
  %1036 = vmatprep.subr.mxu0 0.0
  %1037 = vmatpush1.msra.mxu0 0.0
  %1038 = vmatprep.subr.mxu0 0.0
  %1039 = vmatpush1.msra.mxu0 0.0
  %1040 = vmatprep.subr.mxu0 0.0
  %1041 = vmatpush1.msra.mxu0 0.0
  %1042 = vmatprep.subr.mxu0 0.0
  %1043 = vmatpush1.msra.mxu0 0.0
  %1044 = vmatprep.subr.mxu0 0.0
  %1045 = vmatpush1.msra.mxu0 0.0
  %1046 = vmatprep.subr.mxu0 0.0
  %1047 = vmatpush1.msra.mxu0 0.0
  %1048 = vmatprep.subr.mxu0 0.0
  %1049 = vmatpush1.msra.mxu0 0.0
  %1050 = vmatprep.subr.mxu0 0.0
  %1051 = vmatpush1.msra.mxu0 0.0
  %1052 = vmatprep.subr.mxu0 0.0
  %1053 = vmatpush1.msra.mxu0 0.0
  %1054 = vmatprep.subr.mxu0 0.0
  %1055 = vmatpush1.msra.mxu0 0.0
  %1056 = vmatprep.subr.mxu0 0.0
  %1057 = vmatpush1.msra.mxu0 0.0
  %1058 = vmatprep.subr.mxu0 0.0
  %1059 = vmatpush1.msra.mxu0 0.0
  %1060 = vmatprep.subr.mxu0 0.0
  %1061 = vmatpush1.msra.mxu0 0.0
  %1062 = vmatprep.subr.mxu0 0.0
  %1063 = vmatpush1.msra.mxu0 0.0
  %1064 = vmatprep.subr.mxu0 0.0
  %1065 = vmatpush1.msra.mxu0 0.0
  %1066 = vmatprep.subr.mxu0 0.0
  %1067 = vmatpush1.msra.mxu0 0.0
  %1068 = vmatprep.subr.mxu0 0.0
  %1069 = vmatpush1.msra.mxu0 0.0
  %1070 = vmatprep.subr.mxu0 0.0
  %1071 = vmatpush1.msra.mxu0 0.0
  %1072 = vmatprep.subr.mxu0 0.0
  %1073 = vmatpush1.msra.mxu0 0.0
  %1074 = vmatprep.subr.mxu0 0.0
  %1075 = vmatpush1.msra.mxu0 0.0
  %1076 = vmatprep.subr.mxu0 0.0
  %1077 = vmatpush1.msra.mxu0 0.0
  %1078 = vmatprep.subr.mxu0 0.0
  %1079 = vmatpush1.msra.mxu0 0.0
  %1080 = vmatprep.subr.mxu0 0.0
  %1081 = vmatpush1.msra.mxu0 0.0
  %1082 = vmatprep.mubr.f32.mxu0 0.0
  %1083 = vmatmul.mubr.f32.gmra.mrb[0].mxu0 %v1013
  %v1084 = vpop.f32.mrb[0].mxu0
  %v1085 = vadd.f32 %v1011, %v1084
  %v1086 = vpop.f32.mrb[0].mxu0
  %1087 = vdwg.mxu0
  %v1090 = vrot.slane %v750, 5
  %v1091 = vrot.slane %v751, 5
  %v1092 = vsel %vm227, %v1090, %v1091
  %v1094 = vsel %vm768, %v613, 0
  %v1097 = vsel %vm771, %v46, 0
  %1099 = vmatprep.subr.mxu0 0.0
  %1100 = vmatpush1.msra.mxu0 %v45
  %1101 = vmatprep.subr.mxu0 0.0
  %1102 = vmatpush1.msra.mxu0 %v1097
  %1103 = vmatprep.subr.mxu0 0.0
  %1104 = vmatpush1.msra.mxu0 0.0
  %1105 = vmatprep.subr.mxu0 0.0
  %1106 = vmatpush1.msra.mxu0 0.0
  %1107 = vmatprep.subr.mxu0 0.0
  %1108 = vmatpush1.msra.mxu0 0.0
  %1109 = vmatprep.subr.mxu0 0.0
  %1110 = vmatpush1.msra.mxu0 0.0
  %1111 = vmatprep.subr.mxu0 0.0
  %1112 = vmatpush1.msra.mxu0 0.0
  %1113 = vmatprep.subr.mxu0 0.0
  %1114 = vmatpush1.msra.mxu0 0.0
  %1115 = vmatprep.subr.mxu0 0.0
  %1116 = vmatpush1.msra.mxu0 0.0
  %1117 = vmatprep.subr.mxu0 0.0
  %1118 = vmatpush1.msra.mxu0 0.0
  %1119 = vmatprep.subr.mxu0 0.0
  %1120 = vmatpush1.msra.mxu0 0.0
  %1121 = vmatprep.subr.mxu0 0.0
  %1122 = vmatpush1.msra.mxu0 0.0
  %1123 = vmatprep.subr.mxu0 0.0
  %1124 = vmatpush1.msra.mxu0 0.0
  %1125 = vmatprep.subr.mxu0 0.0
  %1126 = vmatpush1.msra.mxu0 0.0
  %1127 = vmatprep.subr.mxu0 0.0
  %1128 = vmatpush1.msra.mxu0 0.0
  %1129 = vmatprep.subr.mxu0 0.0
  %1130 = vmatpush1.msra.mxu0 0.0
  %1131 = vmatprep.subr.mxu0 0.0
  %1132 = vmatpush1.msra.mxu0 0.0
  %1133 = vmatprep.subr.mxu0 0.0
  %1134 = vmatpush1.msra.mxu0 0.0
  %1135 = vmatprep.subr.mxu0 0.0
  %1136 = vmatpush1.msra.mxu0 0.0
  %1137 = vmatprep.subr.mxu0 0.0
  %1138 = vmatpush1.msra.mxu0 0.0
  %1139 = vmatprep.subr.mxu0 0.0
  %1140 = vmatpush1.msra.mxu0 0.0
  %1141 = vmatprep.subr.mxu0 0.0
  %1142 = vmatpush1.msra.mxu0 0.0
  %1143 = vmatprep.subr.mxu0 0.0
  %1144 = vmatpush1.msra.mxu0 0.0
  %1145 = vmatprep.subr.mxu0 0.0
  %1146 = vmatpush1.msra.mxu0 0.0
  %1147 = vmatprep.subr.mxu0 0.0
  %1148 = vmatpush1.msra.mxu0 0.0
  %1149 = vmatprep.subr.mxu0 0.0
  %1150 = vmatpush1.msra.mxu0 0.0
  %1151 = vmatprep.subr.mxu0 0.0
  %1152 = vmatpush1.msra.mxu0 0.0
  %1153 = vmatprep.subr.mxu0 0.0
  %1154 = vmatpush1.msra.mxu0 0.0
  %1155 = vmatprep.subr.mxu0 0.0
  %1156 = vmatpush1.msra.mxu0 0.0
  %1157 = vmatprep.subr.mxu0 0.0
  %1158 = vmatpush1.msra.mxu0 0.0
  %1159 = vmatprep.subr.mxu0 0.0
  %1160 = vmatpush1.msra.mxu0 0.0
  %1161 = vmatprep.subr.mxu0 0.0
  %1162 = vmatpush1.msra.mxu0 0.0
  %1163 = vmatprep.mubr.f32.mxu0 0.0
  %1164 = vmatmul.mubr.f32.gmra.mrb[0].mxu0 %v1094
  %v1165 = vpop.f32.mrb[0].mxu0
  %v1166 = vadd.f32 %v1092, %v1165
  %v1167 = vpop.f32.mrb[0].mxu0
  %1168 = vdwg.mxu0
  %v1171 = vrot.slane %v752, 5
  %v1172 = vrot.slane %v753, 5
  %v1173 = vsel %vm227, %v1171, %v1172
  %v1175 = vsel %vm768, %v614, 0
  %v1178 = vsel %vm771, %v48, 0
  %1180 = vmatprep.subr.mxu0 0.0
  %1181 = vmatpush1.msra.mxu0 %v47
  %1182 = vmatprep.subr.mxu0 0.0
  %1183 = vmatpush1.msra.mxu0 %v1178
  %1184 = vmatprep.subr.mxu0 0.0
  %1185 = vmatpush1.msra.mxu0 0.0
  %1186 = vmatprep.subr.mxu0 0.0
  %1187 = vmatpush1.msra.mxu0 0.0
  %1188 = vmatprep.subr.mxu0 0.0
  %1189 = vmatpush1.msra.mxu0 0.0
  %1190 = vmatprep.subr.mxu0 0.0
  %1191 = vmatpush1.msra.mxu0 0.0
  %1192 = vmatprep.subr.mxu0 0.0
  %1193 = vmatpush1.msra.mxu0 0.0
  %1194 = vmatprep.subr.mxu0 0.0
  %1195 = vmatpush1.msra.mxu0 0.0
  %1196 = vmatprep.subr.mxu0 0.0
  %1197 = vmatpush1.msra.mxu0 0.0
  %1198 = vmatprep.subr.mxu0 0.0
  %1199 = vmatpush1.msra.mxu0 0.0
  %1200 = vmatprep.subr.mxu0 0.0
  %1201 = vmatpush1.msra.mxu0 0.0
  %1202 = vmatprep.subr.mxu0 0.0
  %1203 = vmatpush1.msra.mxu0 0.0
  %1204 = vmatprep.subr.mxu0 0.0
  %1205 = vmatpush1.msra.mxu0 0.0
  %1206 = vmatprep.subr.mxu0 0.0
  %1207 = vmatpush1.msra.mxu0 0.0
  %1208 = vmatprep.subr.mxu0 0.0
  %1209 = vmatpush1.msra.mxu0 0.0
  %1210 = vmatprep.subr.mxu0 0.0
  %1211 = vmatpush1.msra.mxu0 0.0
  %1212 = vmatprep.subr.mxu0 0.0
  %1213 = vmatpush1.msra.mxu0 0.0
  %1214 = vmatprep.subr.mxu0 0.0
  %1215 = vmatpush1.msra.mxu0 0.0
  %1216 = vmatprep.subr.mxu0 0.0
  %1217 = vmatpush1.msra.mxu0 0.0
  %1218 = vmatprep.subr.mxu0 0.0
  %1219 = vmatpush1.msra.mxu0 0.0
  %1220 = vmatprep.subr.mxu0 0.0
  %1221 = vmatpush1.msra.mxu0 0.0
  %1222 = vmatprep.subr.mxu0 0.0
  %1223 = vmatpush1.msra.mxu0 0.0
  %1224 = vmatprep.subr.mxu0 0.0
  %1225 = vmatpush1.msra.mxu0 0.0
  %1226 = vmatprep.subr.mxu0 0.0
  %1227 = vmatpush1.msra.mxu0 0.0
  %1228 = vmatprep.subr.mxu0 0.0
  %1229 = vmatpush1.msra.mxu0 0.0
  %1230 = vmatprep.subr.mxu0 0.0
  %1231 = vmatpush1.msra.mxu0 0.0
  %1232 = vmatprep.subr.mxu0 0.0
  %1233 = vmatpush1.msra.mxu0 0.0
  %1234 = vmatprep.subr.mxu0 0.0
  %1235 = vmatpush1.msra.mxu0 0.0
  %1236 = vmatprep.subr.mxu0 0.0
  %1237 = vmatpush1.msra.mxu0 0.0
  %1238 = vmatprep.subr.mxu0 0.0
  %1239 = vmatpush1.msra.mxu0 0.0
  %1240 = vmatprep.subr.mxu0 0.0
  %1241 = vmatpush1.msra.mxu0 0.0
  %1242 = vmatprep.subr.mxu0 0.0
  %1243 = vmatpush1.msra.mxu0 0.0
  %1244 = vmatprep.mubr.f32.mxu0 0.0
  %1245 = vmatmul.mubr.f32.gmra.mrb[0].mxu0 %v1175
  %v1246 = vpop.f32.mrb[0].mxu0
  %v1247 = vadd.f32 %v1173, %v1246
  %v1248 = vpop.f32.mrb[0].mxu0
  %1249 = vdwg.mxu0
  %v1252 = vrot.slane %v754, 5
  %v1253 = vrot.slane %v755, 5
  %v1254 = vsel %vm227, %v1252, %v1253
  %v1256 = vsel %vm768, %v615, 0
  %v1259 = vsel %vm771, %v50, 0
  %1261 = vmatprep.subr.mxu0 0.0
  %1262 = vmatpush1.msra.mxu0 %v49
  %1263 = vmatprep.subr.mxu0 0.0
  %1264 = vmatpush1.msra.mxu0 %v1259
  %1265 = vmatprep.subr.mxu0 0.0
  %1266 = vmatpush1.msra.mxu0 0.0
  %1267 = vmatprep.subr.mxu0 0.0
  %1268 = vmatpush1.msra.mxu0 0.0
  %1269 = vmatprep.subr.mxu0 0.0
  %1270 = vmatpush1.msra.mxu0 0.0
  %1271 = vmatprep.subr.mxu0 0.0
  %1272 = vmatpush1.msra.mxu0 0.0
  %1273 = vmatprep.subr.mxu0 0.0
  %1274 = vmatpush1.msra.mxu0 0.0
  %1275 = vmatprep.subr.mxu0 0.0
  %1276 = vmatpush1.msra.mxu0 0.0
  %1277 = vmatprep.subr.mxu0 0.0
  %1278 = vmatpush1.msra.mxu0 0.0
  %1279 = vmatprep.subr.mxu0 0.0
  %1280 = vmatpush1.msra.mxu0 0.0
  %1281 = vmatprep.subr.mxu0 0.0
  %1282 = vmatpush1.msra.mxu0 0.0
  %1283 = vmatprep.subr.mxu0 0.0
  %1284 = vmatpush1.msra.mxu0 0.0
  %1285 = vmatprep.subr.mxu0 0.0
  %1286 = vmatpush1.msra.mxu0 0.0
  %1287 = vmatprep.subr.mxu0 0.0
  %1288 = vmatpush1.msra.mxu0 0.0
  %1289 = vmatprep.subr.mxu0 0.0
  %1290 = vmatpush1.msra.mxu0 0.0
  %1291 = vmatprep.subr.mxu0 0.0
  %1292 = vmatpush1.msra.mxu0 0.0
  %1293 = vmatprep.subr.mxu0 0.0
  %1294 = vmatpush1.msra.mxu0 0.0
  %1295 = vmatprep.subr.mxu0 0.0
  %1296 = vmatpush1.msra.mxu0 0.0
  %1297 = vmatprep.subr.mxu0 0.0
  %1298 = vmatpush1.msra.mxu0 0.0
  %1299 = vmatprep.subr.mxu0 0.0
  %1300 = vmatpush1.msra.mxu0 0.0
  %1301 = vmatprep.subr.mxu0 0.0
  %1302 = vmatpush1.msra.mxu0 0.0
  %1303 = vmatprep.subr.mxu0 0.0
  %1304 = vmatpush1.msra.mxu0 0.0
  %1305 = vmatprep.subr.mxu0 0.0
  %1306 = vmatpush1.msra.mxu0 0.0
  %1307 = vmatprep.subr.mxu0 0.0
  %1308 = vmatpush1.msra.mxu0 0.0
  %1309 = vmatprep.subr.mxu0 0.0
  %1310 = vmatpush1.msra.mxu0 0.0
  %1311 = vmatprep.subr.mxu0 0.0
  %1312 = vmatpush1.msra.mxu0 0.0
  %1313 = vmatprep.subr.mxu0 0.0
  %1314 = vmatpush1.msra.mxu0 0.0
  %1315 = vmatprep.subr.mxu0 0.0
  %1316 = vmatpush1.msra.mxu0 0.0
  %1317 = vmatprep.subr.mxu0 0.0
  %1318 = vmatpush1.msra.mxu0 0.0
  %1319 = vmatprep.subr.mxu0 0.0
  %1320 = vmatpush1.msra.mxu0 0.0
  %1321 = vmatprep.subr.mxu0 0.0
  %1322 = vmatpush1.msra.mxu0 0.0
  %1323 = vmatprep.subr.mxu0 0.0
  %1324 = vmatpush1.msra.mxu0 0.0
  %1325 = vmatprep.mubr.f32.mxu0 0.0
  %1326 = vmatmul.mubr.f32.gmra.mrb[0].mxu0 %v1256
  %v1327 = vpop.f32.mrb[0].mxu0
  %v1328 = vadd.f32 %v1254, %v1327
  %v1329 = vpop.f32.mrb[0].mxu0
  %1330 = vdwg.mxu0
  %v1333 = vrot.slane %v756, 5
  %v1334 = vrot.slane %v757, 5
  %v1335 = vsel %vm227, %v1333, %v1334
  %v1337 = vsel %vm768, %v616, 0
  %v1340 = vsel %vm771, %v52, 0
  %1342 = vmatprep.subr.mxu0 0.0
  %1343 = vmatpush1.msra.mxu0 %v51
  %1344 = vmatprep.subr.mxu0 0.0
  %1345 = vmatpush1.msra.mxu0 %v1340
  %1346 = vmatprep.subr.mxu0 0.0
  %1347 = vmatpush1.msra.mxu0 0.0
  %1348 = vmatprep.subr.mxu0 0.0
  %1349 = vmatpush1.msra.mxu0 0.0
  %1350 = vmatprep.subr.mxu0 0.0
  %1351 = vmatpush1.msra.mxu0 0.0
  %1352 = vmatprep.subr.mxu0 0.0
  %1353 = vmatpush1.msra.mxu0 0.0
  %1354 = vmatprep.subr.mxu0 0.0
  %1355 = vmatpush1.msra.mxu0 0.0
  %1356 = vmatprep.subr.mxu0 0.0
  %1357 = vmatpush1.msra.mxu0 0.0
  %1358 = vmatprep.subr.mxu0 0.0
  %1359 = vmatpush1.msra.mxu0 0.0
  %1360 = vmatprep.subr.mxu0 0.0
  %1361 = vmatpush1.msra.mxu0 0.0
  %1362 = vmatprep.subr.mxu0 0.0
  %1363 = vmatpush1.msra.mxu0 0.0
  %1364 = vmatprep.subr.mxu0 0.0
  %1365 = vmatpush1.msra.mxu0 0.0
  %1366 = vmatprep.subr.mxu0 0.0
  %1367 = vmatpush1.msra.mxu0 0.0
  %1368 = vmatprep.subr.mxu0 0.0
  %1369 = vmatpush1.msra.mxu0 0.0
  %1370 = vmatprep.subr.mxu0 0.0
  %1371 = vmatpush1.msra.mxu0 0.0
  %1372 = vmatprep.subr.mxu0 0.0
  %1373 = vmatpush1.msra.mxu0 0.0
  %1374 = vmatprep.subr.mxu0 0.0
  %1375 = vmatpush1.msra.mxu0 0.0
  %1376 = vmatprep.subr.mxu0 0.0
  %1377 = vmatpush1.msra.mxu0 0.0
  %1378 = vmatprep.subr.mxu0 0.0
  %1379 = vmatpush1.msra.mxu0 0.0
  %1380 = vmatprep.subr.mxu0 0.0
  %1381 = vmatpush1.msra.mxu0 0.0
  %1382 = vmatprep.subr.mxu0 0.0
  %1383 = vmatpush1.msra.mxu0 0.0
  %1384 = vmatprep.subr.mxu0 0.0
  %1385 = vmatpush1.msra.mxu0 0.0
  %1386 = vmatprep.subr.mxu0 0.0
  %1387 = vmatpush1.msra.mxu0 0.0
  %1388 = vmatprep.subr.mxu0 0.0
  %1389 = vmatpush1.msra.mxu0 0.0
  %1390 = vmatprep.subr.mxu0 0.0
  %1391 = vmatpush1.msra.mxu0 0.0
  %1392 = vmatprep.subr.mxu0 0.0
  %1393 = vmatpush1.msra.mxu0 0.0
  %1394 = vmatprep.subr.mxu0 0.0
  %1395 = vmatpush1.msra.mxu0 0.0
  %1396 = vmatprep.subr.mxu0 0.0
  %1397 = vmatpush1.msra.mxu0 0.0
  %1398 = vmatprep.subr.mxu0 0.0
  %1399 = vmatpush1.msra.mxu0 0.0
  %1400 = vmatprep.subr.mxu0 0.0
  %1401 = vmatpush1.msra.mxu0 0.0
  %1402 = vmatprep.subr.mxu0 0.0
  %1403 = vmatpush1.msra.mxu0 0.0
  %1404 = vmatprep.subr.mxu0 0.0
  %1405 = vmatpush1.msra.mxu0 0.0
  %1406 = vmatprep.mubr.f32.mxu0 0.0
  %1407 = vmatmul.mubr.f32.gmra.mrb[0].mxu0 %v1337
  %v1408 = vpop.f32.mrb[0].mxu0
  %v1409 = vadd.f32 %v1335, %v1408
  %v1410 = vpop.f32.mrb[0].mxu0
  %1411 = vdwg.mxu0
  %v1414 = vrot.slane %v758, 5
  %v1415 = vrot.slane %v759, 5
  %v1416 = vsel %vm227, %v1414, %v1415
  %v1418 = vsel %vm768, %v617, 0
  %v1421 = vsel %vm771, %v54, 0
  %1423 = vmatprep.subr.mxu0 0.0
  %1424 = vmatpush1.msra.mxu0 %v53
  %1425 = vmatprep.subr.mxu0 0.0
  %1426 = vmatpush1.msra.mxu0 %v1421
  %1427 = vmatprep.subr.mxu0 0.0
  %1428 = vmatpush1.msra.mxu0 0.0
  %1429 = vmatprep.subr.mxu0 0.0
  %1430 = vmatpush1.msra.mxu0 0.0
  %1431 = vmatprep.subr.mxu0 0.0
  %1432 = vmatpush1.msra.mxu0 0.0
  %1433 = vmatprep.subr.mxu0 0.0
  %1434 = vmatpush1.msra.mxu0 0.0
  %1435 = vmatprep.subr.mxu0 0.0
  %1436 = vmatpush1.msra.mxu0 0.0
  %1437 = vmatprep.subr.mxu0 0.0
  %1438 = vmatpush1.msra.mxu0 0.0
  %1439 = vmatprep.subr.mxu0 0.0
  %1440 = vmatpush1.msra.mxu0 0.0
  %1441 = vmatprep.subr.mxu0 0.0
  %1442 = vmatpush1.msra.mxu0 0.0
  %1443 = vmatprep.subr.mxu0 0.0
  %1444 = vmatpush1.msra.mxu0 0.0
  %1445 = vmatprep.subr.mxu0 0.0
  %1446 = vmatpush1.msra.mxu0 0.0
  %1447 = vmatprep.subr.mxu0 0.0
  %1448 = vmatpush1.msra.mxu0 0.0
  %1449 = vmatprep.subr.mxu0 0.0
  %1450 = vmatpush1.msra.mxu0 0.0
  %1451 = vmatprep.subr.mxu0 0.0
  %1452 = vmatpush1.msra.mxu0 0.0
  %1453 = vmatprep.subr.mxu0 0.0
  %1454 = vmatpush1.msra.mxu0 0.0
  %1455 = vmatprep.subr.mxu0 0.0
  %1456 = vmatpush1.msra.mxu0 0.0
  %1457 = vmatprep.subr.mxu0 0.0
  %1458 = vmatpush1.msra.mxu0 0.0
  %1459 = vmatprep.subr.mxu0 0.0
  %1460 = vmatpush1.msra.mxu0 0.0
  %1461 = vmatprep.subr.mxu0 0.0
  %1462 = vmatpush1.msra.mxu0 0.0
  %1463 = vmatprep.subr.mxu0 0.0
  %1464 = vmatpush1.msra.mxu0 0.0
  %1465 = vmatprep.subr.mxu0 0.0
  %1466 = vmatpush1.msra.mxu0 0.0
  %1467 = vmatprep.subr.mxu0 0.0
  %1468 = vmatpush1.msra.mxu0 0.0
  %1469 = vmatprep.subr.mxu0 0.0
  %1470 = vmatpush1.msra.mxu0 0.0
  %1471 = vmatprep.subr.mxu0 0.0
  %1472 = vmatpush1.msra.mxu0 0.0
  %1473 = vmatprep.subr.mxu0 0.0
  %1474 = vmatpush1.msra.mxu0 0.0
  %1475 = vmatprep.subr.mxu0 0.0
  %1476 = vmatpush1.msra.mxu0 0.0
  %1477 = vmatprep.subr.mxu0 0.0
  %1478 = vmatpush1.msra.mxu0 0.0
  %1479 = vmatprep.subr.mxu0 0.0
  %1480 = vmatpush1.msra.mxu0 0.0
  %1481 = vmatprep.subr.mxu0 0.0
  %1482 = vmatpush1.msra.mxu0 0.0
  %1483 = vmatprep.subr.mxu0 0.0
  %1484 = vmatpush1.msra.mxu0 0.0
  %1485 = vmatprep.subr.mxu0 0.0
  %1486 = vmatpush1.msra.mxu0 0.0
  %1487 = vmatprep.mubr.f32.mxu0 0.0
  %1488 = vmatmul.mubr.f32.gmra.mrb[0].mxu0 %v1418
  %v1489 = vpop.f32.mrb[0].mxu0
  %v1490 = vadd.f32 %v1416, %v1489
  %v1491 = vpop.f32.mrb[0].mxu0
  %1492 = vdwg.mxu0
  %v1495 = vrot.slane %v760, 5
  %v1496 = vrot.slane %v761, 5
  %v1497 = vsel %vm227, %v1495, %v1496
  %v1499 = vsel %vm768, %v618, 0
  %v1502 = vsel %vm771, %v56, 0
  %1504 = vmatprep.subr.mxu0 0.0
  %1505 = vmatpush1.msra.mxu0 %v55
  %1506 = vmatprep.subr.mxu0 0.0
  %1507 = vmatpush1.msra.mxu0 %v1502
  %1508 = vmatprep.subr.mxu0 0.0
  %1509 = vmatpush1.msra.mxu0 0.0
  %1510 = vmatprep.subr.mxu0 0.0
  %1511 = vmatpush1.msra.mxu0 0.0
  %1512 = vmatprep.subr.mxu0 0.0
  %1513 = vmatpush1.msra.mxu0 0.0
  %1514 = vmatprep.subr.mxu0 0.0
  %1515 = vmatpush1.msra.mxu0 0.0
  %1516 = vmatprep.subr.mxu0 0.0
  %1517 = vmatpush1.msra.mxu0 0.0
  %1518 = vmatprep.subr.mxu0 0.0
  %1519 = vmatpush1.msra.mxu0 0.0
  %1520 = vmatprep.subr.mxu0 0.0
  %1521 = vmatpush1.msra.mxu0 0.0
  %1522 = vmatprep.subr.mxu0 0.0
  %1523 = vmatpush1.msra.mxu0 0.0
  %1524 = vmatprep.subr.mxu0 0.0
  %1525 = vmatpush1.msra.mxu0 0.0
  %1526 = vmatprep.subr.mxu0 0.0
  %1527 = vmatpush1.msra.mxu0 0.0
  %1528 = vmatprep.subr.mxu0 0.0
  %1529 = vmatpush1.msra.mxu0 0.0
  %1530 = vmatprep.subr.mxu0 0.0
  %1531 = vmatpush1.msra.mxu0 0.0
  %1532 = vmatprep.subr.mxu0 0.0
  %1533 = vmatpush1.msra.mxu0 0.0
  %1534 = vmatprep.subr.mxu0 0.0
  %1535 = vmatpush1.msra.mxu0 0.0
  %1536 = vmatprep.subr.mxu0 0.0
  %1537 = vmatpush1.msra.mxu0 0.0
  %1538 = vmatprep.subr.mxu0 0.0
  %1539 = vmatpush1.msra.mxu0 0.0
  %1540 = vmatprep.subr.mxu0 0.0
  %1541 = vmatpush1.msra.mxu0 0.0
  %1542 = vmatprep.subr.mxu0 0.0
  %1543 = vmatpush1.msra.mxu0 0.0
  %1544 = vmatprep.subr.mxu0 0.0
  %1545 = vmatpush1.msra.mxu0 0.0
  %1546 = vmatprep.subr.mxu0 0.0
  %1547 = vmatpush1.msra.mxu0 0.0
  %1548 = vmatprep.subr.mxu0 0.0
  %1549 = vmatpush1.msra.mxu0 0.0
  %1550 = vmatprep.subr.mxu0 0.0
  %1551 = vmatpush1.msra.mxu0 0.0
  %1552 = vmatprep.subr.mxu0 0.0
  %1553 = vmatpush1.msra.mxu0 0.0
  %1554 = vmatprep.subr.mxu0 0.0
  %1555 = vmatpush1.msra.mxu0 0.0
  %1556 = vmatprep.subr.mxu0 0.0
  %1557 = vmatpush1.msra.mxu0 0.0
  %1558 = vmatprep.subr.mxu0 0.0
  %1559 = vmatpush1.msra.mxu0 0.0
  %1560 = vmatprep.subr.mxu0 0.0
  %1561 = vmatpush1.msra.mxu0 0.0
  %1562 = vmatprep.subr.mxu0 0.0
  %1563 = vmatpush1.msra.mxu0 0.0
  %1564 = vmatprep.subr.mxu0 0.0
  %1565 = vmatpush1.msra.mxu0 0.0
  %1566 = vmatprep.subr.mxu0 0.0
  %1567 = vmatpush1.msra.mxu0 0.0
  %1568 = vmatprep.mubr.f32.mxu0 0.0
  %1569 = vmatmul.mubr.f32.gmra.mrb[0].mxu0 %v1499
  %v1570 = vpop.f32.mrb[0].mxu0
  %v1571 = vadd.f32 %v1497, %v1570
  %v1572 = vpop.f32.mrb[0].mxu0
  %1573 = vdwg.mxu0
  %1575 = vset.pattern.permute.xlu0 8
  %1576 = vperm.xlu0 %1575, %v619
  %v1577 = vpop.permute.xlu0 %1576
  %1580 = vset.pattern.permute.xlu0 8
  %1581 = vperm.xlu0 %1580, %v620
  %v1582 = vpop.permute.xlu0 %1581
  %1585 = vset.pattern.permute.xlu0 8
  %1586 = vperm.xlu0 %1585, %v621
  %v1587 = vpop.permute.xlu0 %1586
  %1590 = vset.pattern.permute.xlu0 8
  %1591 = vperm.xlu0 %1590, %v622
  %v1592 = vpop.permute.xlu0 %1591
  %1595 = vset.pattern.permute.xlu0 8
  %1596 = vperm.xlu0 %1595, %v623
  %v1597 = vpop.permute.xlu0 %1596
  %1600 = vset.pattern.permute.xlu0 8
  %1601 = vperm.xlu0 %1600, %v624
  %v1602 = vpop.permute.xlu0 %1601
  %1605 = vset.pattern.permute.xlu0 8
  %1606 = vperm.xlu0 %1605, %v625
  %v1607 = vpop.permute.xlu0 %1606
  %1610 = vset.pattern.permute.xlu0 8
  %1611 = vperm.xlu0 %1610, %v626
  %v1612 = vpop.permute.xlu0 %1611
  %1615 = vset.pattern.permute.xlu0 8
  %1616 = vperm.xlu0 %1615, %v627
  %v1617 = vpop.permute.xlu0 %1616
  %1620 = vset.pattern.permute.xlu0 8
  %1621 = vperm.xlu0 %1620, %v628
  %v1622 = vpop.permute.xlu0 %1621
  %v1624 = vmul.f32 %v57, %v1577
  %v1625 = vmul.f32 %v58, %v1582
  %v1626 = vmul.f32 %v59, %v1587
  %v1627 = vmul.f32 %v60, %v1592
  %v1628 = vmul.f32 %v61, %v1597
  %v1629 = vmul.f32 %v62, %v1602
  %v1630 = vmul.f32 %v63, %v1607
  %v1631 = vmul.f32 %v64, %v1612
  %v1632 = vmul.f32 %v65, %v1617
  %v1633 = vmul.f32 %v66, %v1622
  %v1634 = vadd.f32 %v842, %v1624
  %v1635 = vadd.f32 %v923, %v1625
  %v1636 = vadd.f32 %v1004, %v1626
  %v1637 = vadd.f32 %v1085, %v1627
  %v1638 = vadd.f32 %v1166, %v1628
  %v1639 = vadd.f32 %v1247, %v1629
  %v1640 = vadd.f32 %v1328, %v1630
  %v1641 = vadd.f32 %v1409, %v1631
  %v1642 = vadd.f32 %v1490, %v1632
  %v1643 = vadd.f32 %v1571, %v1633
  %v1644 = vxor.u32 %v1634, 2147483648
  %v1645 = vxor.u32 %v1635, 2147483648
  %v1646 = vxor.u32 %v1636, 2147483648
  %v1647 = vxor.u32 %v1637, 2147483648
  %v1648 = vxor.u32 %v1638, 2147483648
  %v1649 = vxor.u32 %v1639, 2147483648
  %v1650 = vxor.u32 %v1640, 2147483648
  %v1651 = vxor.u32 %v1641, 2147483648
  %v1652 = vxor.u32 %v1642, 2147483648
  %v1653 = vxor.u32 %v1643, 2147483648
  %v1654 = vmul.f32 %v1644, 1.442695
  %v1655 = vpow.pop %v1654
  %v1656 = vmul.f32 %v1645, 1.442695
  %v1657 = vpow.pop %v1656
  %v1658 = vmul.f32 %v1646, 1.442695
  %v1659 = vpow.pop %v1658
  %v1660 = vmul.f32 %v1647, 1.442695
  %v1661 = vpow.pop %v1660
  %v1662 = vmul.f32 %v1648, 1.442695
  %v1663 = vpow.pop %v1662
  %v1664 = vmul.f32 %v1649, 1.442695
  %v1665 = vpow.pop %v1664
  %v1666 = vmul.f32 %v1650, 1.442695
  %v1667 = vpow.pop %v1666
  %v1668 = vmul.f32 %v1651, 1.442695
  %v1669 = vpow.pop %v1668
  %v1670 = vmul.f32 %v1652, 1.442695
  %v1671 = vpow.pop %v1670
  %v1672 = vmul.f32 %v1653, 1.442695
  %v1673 = vpow.pop %v1672
  %v1674 = vadd.f32 %v1655, 1.0
  %v1675 = vadd.f32 %v1657, 1.0
  %v1676 = vadd.f32 %v1659, 1.0
  %v1677 = vadd.f32 %v1661, 1.0
  %v1678 = vadd.f32 %v1663, 1.0
  %v1679 = vadd.f32 %v1665, 1.0
  %v1680 = vadd.f32 %v1667, 1.0
  %v1681 = vadd.f32 %v1669, 1.0
  %v1682 = vadd.f32 %v1671, 1.0
  %v1683 = vadd.f32 %v1673, 1.0
  %v1684 = vrcp.pop %v1674
  %v1685 = vmul.f32 1.0, %v1684
  %v1686 = vrcp.pop %v1675
  %v1687 = vmul.f32 1.0, %v1686
  %v1688 = vrcp.pop %v1676
  %v1689 = vmul.f32 1.0, %v1688
  %v1690 = vrcp.pop %v1677
  %v1691 = vmul.f32 1.0, %v1690
  %v1692 = vrcp.pop %v1678
  %v1693 = vmul.f32 1.0, %v1692
  %v1694 = vrcp.pop %v1679
  %v1695 = vmul.f32 1.0, %v1694
  %v1696 = vrcp.pop %v1680
  %v1697 = vmul.f32 1.0, %v1696
  %v1698 = vrcp.pop %v1681
  %v1699 = vmul.f32 1.0, %v1698
  %v1700 = vrcp.pop %v1682
  %v1701 = vmul.f32 1.0, %v1700
  %v1702 = vrcp.pop %v1683
  %v1703 = vmul.f32 1.0, %v1702
  %vm1704 = vcmask 61440
  %1705 = vst.msk [vmem:[%s4] sm:$0x1f] %vm1704, %v1685
  %1706 = vst.msk [vmem:[%s4 + $0x8] sm:$0x1f] %vm1704, %v1687
  %1707 = vst.msk [vmem:[%s4 + $0x10] sm:$0x1f] %vm1704, %v1689
  %1708 = vst.msk [vmem:[%s4 + $0x18] sm:$0x1f] %vm1704, %v1691
  %1709 = vst.msk [vmem:[%s4 + $0x20] sm:$0x1f] %vm1704, %v1693
  %1710 = vst.msk [vmem:[%s4 + $0x28] sm:$0x1f] %vm1704, %v1695
  %1711 = vst.msk [vmem:[%s4 + $0x30] sm:$0x1f] %vm1704, %v1697
  %1712 = vst.msk [vmem:[%s4 + $0x38] sm:$0x1f] %vm1704, %v1699
  %1713 = vst.msk [vmem:[%s4 + $0x40] sm:$0x1f] %vm1704, %v1701
  %1714 = vst.msk [vmem:[%s4 + $0x48] sm:$0x1f] %vm1704, %v1703
  // Predicated region
  $region18: #{tpu_custom_call.1} parent=0 // pred_check
    _
  $region19: #{tpu_custom_call.1} parent=0 // pred_check_branch
    %1716 = sbr.rel (0) target = $region21
  $region20: #{tpu_custom_call.1} parent=0 // pred_region
    _
  $region21: #{tpu_custom_call.1} parent=0 // pred_fallthru
    _
  // Predicated region
  $region22: #{tpu_custom_call.1} parent=0 // pred_check
    _
  $region23: #{tpu_custom_call.1} parent=0 // pred_check_branch
    %1718 = sbr.rel (0) target = $region25
  $region24: #{tpu_custom_call.1} parent=0 // pred_region
    _
  $region25: #{tpu_custom_call.1} parent=0 // pred_fallthru
    _

</llo_original>
